<compile_context>
chip_gen: v7x
topology: tpu7x:2x2x1
jax: 0.10.0
libtpu: 0.0.40
codegen_flags: <defaults>
</compile_context>

<pallas_src>
import functools

import jax
import jax.numpy as jnp
from jax import lax
from jax.experimental import pallas as pl
from jax.experimental.pallas import tpu as pltpu

D_MODEL = 32
NHEAD = 4
HEAD_DIM = D_MODEL // NHEAD
DIM_FF = 64
LN_EPS = 1e-5


def _layer_norm(x, gamma, beta):
    """Biased-variance LayerNorm over the last axis (matches torch.nn.LayerNorm)."""
    mu = jnp.mean(x, axis=-1, keepdims=True)
    var = jnp.mean((x - mu) ** 2, axis=-1, keepdims=True)
    return (x - mu) * lax.rsqrt(var + LN_EPS) * gamma + beta


# --------------------------------------------------------------------------
# Fused kernel: MHA + residual + LN1 + FFN + residual + LN2 for a batch chunk.
#   src_ref : (Bt, S, E) activation block
#   wqkv    : (E, 3E)  fused in_proj (already transposed); bqkv: (1, 3E)
#   wo_t    : (E, E)   out_proj.weight.T;                  bo  : (1, E)
#   w1_t    : (E, FF)  linear1.weight.T;                   b1  : (1, FF)
#   w2_t    : (FF, E)  linear2.weight.T;                   b2  : (1, E)
#   g1/bn1, g2/bn2 : (1, E) LayerNorm affine params
# --------------------------------------------------------------------------
def _fused_layer_kernel(src_ref, wqkv_ref, bqkv_ref, wo_ref, bo_ref,
                        w1_ref, b1_ref, w2_ref, b2_ref,
                        g1_ref, bn1_ref, g2_ref, bn2_ref,
                        out_ref, *, sep):
    Bt, S, E = src_ref.shape
    H, Dh = NHEAD, HEAD_DIM
    scale = 1.0 / (Dh ** 0.5)
    sk = S if sep is None else sep  # keys/values restricted to [0:sep] in the split case

    # Hoist weight loads out of the batch loop.
    wqkv = wqkv_ref[...]
    bqkv = bqkv_ref[...]
    wo = wo_ref[...]
    bo = bo_ref[...]
    w1 = w1_ref[...]
    b1 = b1_ref[...]
    w2 = w2_ref[...]
    b2 = b2_ref[...]
    g1 = g1_ref[...]
    bn1 = bn1_ref[...]
    g2 = g2_ref[...]
    bn2 = bn2_ref[...]

    for b in range(Bt):  # static unroll over the batch rows of this block
        x = src_ref[b].astype(jnp.float32)                      # (S, E)

        # ---- fused QKV projection: one (S,E)x(E,3E) matmul ----
        qkv = jnp.dot(x, wqkv, preferred_element_type=jnp.float32) + bqkv  # (S, 3E)
        q = qkv[:, :E]                                           # (S, E)
        k = qkv[:sk, E:2 * E]                                    # (sk, E)
        v = qkv[:sk, 2 * E:]                                     # (sk, E)

        # ---- per-head scaled-dot-product attention ----
        heads = []
        for h in range(H):  # static unrolled loop over heads
            hs = slice(h * Dh, (h + 1) * Dh)
            s = jnp.dot(q[:, hs], k[:, hs].T,
                        preferred_element_type=jnp.float32) * scale        # (S, sk)
            s = s - jnp.max(s, axis=-1, keepdims=True)
            p = jnp.exp(s)
            denom = jnp.sum(p, axis=-1, keepdims=True)
            p = p * pl.reciprocal(denom, approx=True)            # EUP slot, VALU stays free
            heads.append(jnp.dot(p, v[:, hs], preferred_element_type=jnp.float32))
        o_cat = jnp.concatenate(heads, axis=-1)                  # (S, E), head-major (torch order)

        # ---- single wide output projection ----
        attn = jnp.dot(o_cat, wo, preferred_element_type=jnp.float32) + bo

        # ---- residual + LayerNorm1 ----
        xn = _layer_norm(x + attn, g1, bn1)

        # ---- feed-forward (dropout = identity in eval mode) ----
        f = jnp.dot(xn, w1, preferred_element_type=jnp.float32) + b1
        f = jnp.maximum(f, 0.0)                                  # relu
        y = jnp.dot(f, w2, preferred_element_type=jnp.float32) + b2

        # ---- residual + LayerNorm2 ----
        out_ref[b] = _layer_norm(xn + y, g2, bn2).astype(out_ref.dtype)


def _full_spec(shape):
    return pl.BlockSpec(shape, lambda i, _n=len(shape): (0,) * _n)


def fused_layer_forward(x_bse, params, *, single_eval_pos=None, batch_block=None):
    """x_bse: (B, S, E) -> (B, S, E). One fused pallas_call for the whole layer."""
    B, S, E = x_bse.shape
    Bt = B if batch_block is None else min(batch_block, B)
    assert B % Bt == 0, "batch_block must divide the batch size"
    grid = (B // Bt,)

    sk = S if single_eval_pos is None else int(single_eval_pos)
    flops_per_b = (2 * S * E * 3 * E          # QKV
                   + 2 * S * sk * E * 2       # scores + p@v (all heads)
                   + 2 * S * E * E            # out proj
                   + 2 * S * E * DIM_FF * 2)  # FFN up + down
    cost = pl.CostEstimate(
        flops=int(B * flops_per_b),
        transcendentals=int(B * (NHEAD * S * sk + NHEAD * S)),
        bytes_accessed=int(2 * B * S * E * 4
                           + (3 * E * E + E * E + 2 * E * DIM_FF + 8 * E) * 4),
    )

    kern = functools.partial(_fused_layer_kernel, sep=single_eval_pos)

    return pl.pallas_call(
        kern,
        out_shape=jax.ShapeDtypeStruct((B, S, E), x_bse.dtype),
        grid=grid,
        in_specs=[
            pl.BlockSpec((Bt, S, E), lambda i: (i, 0, 0)),
            _full_spec(params["wqkv"].shape), _full_spec(params["bqkv"].shape),
            _full_spec(params["wo_t"].shape), _full_spec(params["bo"].shape),
            _full_spec(params["w1_t"].shape), _full_spec(params["b1"].shape),
            _full_spec(params["w2_t"].shape), _full_spec(params["b2"].shape),
            _full_spec(params["g1"].shape), _full_spec(params["bn1"].shape),
            _full_spec(params["g2"].shape), _full_spec(params["bn2"].shape),
        ],
        out_specs=pl.BlockSpec((Bt, S, E), lambda i: (i, 0, 0)),
        compiler_params=pltpu.CompilerParams(dimension_semantics=("parallel",)),
        cost_estimate=cost,
    )(x_bse, params["wqkv"], params["bqkv"], params["wo_t"], params["bo"],
      params["w1_t"], params["b1"], params["w2_t"], params["b2"],
      params["g1"], params["bn1"], params["g2"], params["bn2"])


# --------------------------------------------------------------------------
# Public wrapper: matches TransformerEncoderLayer.forward (batch_first=False)
# --------------------------------------------------------------------------
def transformer_encoder_layer(src, params, single_eval_pos=None):
    """src: (S, B, E). `single_eval_pos` mimics the `isinstance(src_mask, int)` branch;
    None mimics src_mask=None."""
    # TODO(synk): the (S,B,E)<->(B,S,E) transposes stay outside the kernel; blocking the
    #             middle batch dim directly would require sublane-dim ref gathers in Mosaic.
    x = jnp.transpose(src, (1, 0, 2))                 # (B, S, E)
    sep = None if single_eval_pos is None else int(single_eval_pos)
    out = fused_layer_forward(x, params, single_eval_pos=sep)
    return jnp.transpose(out, (1, 0, 2))              # back to (S, B, E)


# --------------------------------------------------------------------------
# Deterministic parameter init (shapes from the module's __init__)
# --------------------------------------------------------------------------
def init_params(key):
    E, FF = D_MODEL, DIM_FF
    ks = jax.random.split(key, 12)
    s = 0.1
    in_proj_w = jax.random.normal(ks[0], (3 * E, E), jnp.float32) * s   # torch in_proj_weight
    in_proj_b = jax.random.normal(ks[1], (3 * E,), jnp.float32) * s
    out_w = jax.random.normal(ks[2], (E, E), jnp.float32) * s           # out_proj.weight
    out_b = jax.random.normal(ks[3], (E,), jnp.float32) * s
    w1 = jax.random.normal(ks[4], (FF, E), jnp.float32) * s             # linear1.weight
    b1 = jax.random.normal(ks[5], (FF,), jnp.float32) * s
    w2 = jax.random.normal(ks[6], (E, FF), jnp.float32) * s             # linear2.weight
    b2 = jax.random.normal(ks[7], (E,), jnp.float32) * s
    g1 = 1.0 + 0.1 * jax.random.normal(ks[8], (E,), jnp.float32)
    bn1 = 0.1 * jax.random.normal(ks[9], (E,), jnp.float32)
    g2 = 1.0 + 0.1 * jax.random.normal(ks[10], (E,), jnp.float32)
    bn2 = 0.1 * jax.random.normal(ks[11], (E,), jnp.float32)

    return dict(
        wqkv=in_proj_w.T,                  # (E, 3E): x @ wqkv == x @ in_proj_weight.T
        bqkv=in_proj_b.reshape(1, 3 * E),
        wo_t=out_w.T,                      # (E, E): o_cat @ out_proj.weight.T
        bo=out_b.reshape(1, E),
        w1_t=w1.T, b1=b1.reshape(1, FF),
        w2_t=w2.T, b2=b2.reshape(1, E),
        g1=g1.reshape(1, E), bn1=bn1.reshape(1, E),
        g2=g2.reshape(1, E), bn2=bn2.reshape(1, E),
    )


# --------------------------------------------------------------------------
# Pure-JAX reference (correctness check; uses the torch two-call split form)
# --------------------------------------------------------------------------
def _ref_attn(q_src, kv_src, p):
    E, H, Dh = D_MODEL, NHEAD, HEAD_DIM
    q = q_src @ p["wqkv"][:, :E] + p["bqkv"][0, :E]
    k = kv_src @ p["wqkv"][:, E:2 * E] + p["bqkv"][0, E:2 * E]
    v = kv_src @ p["wqkv"][:, 2 * E:] + p["bqkv"][0, 2 * E:]
    qh = q.reshape(q.shape[0], q.shape[1], H, Dh)
    kh = k.reshape(k.shape[0], k.shape[1], H, Dh)
    vh = v.reshape(v.shape[0], v.shape[1], H, Dh)
    s = jnp.einsum("bqhd,bkhd->bhqk", qh, kh) / jnp.sqrt(jnp.float32(Dh))
    a = jax.nn.softmax(s, axis=-1)
    o = jnp.einsum("bhqk,bkhd->bqhd", a, vh).reshape(q.shape[0], q.shape[1], E)
    return o @ p["wo_t"] + p["bo"][0]


def _ref_layer(src, p, single_eval_pos=None):
    x = jnp.transpose(src, (1, 0, 2)).astype(jnp.float32)
    if single_eval_pos is None:
        s2 = _ref_attn(x, x, p)
    else:
        sep = int(single_eval_pos)
        s2 = jnp.concatenate(
            [_ref_attn(x[:, :sep], x[:, :sep], p),
             _ref_attn(x[:, sep:], x[:, :sep], p)], axis=1)

    def ln(v, g, b):
        mu = v.mean(-1, keepdims=True)
        var = ((v - mu) ** 2).mean(-1, keepdims=True)
        return (v - mu) / jnp.sqrt(var + LN_EPS) * g + b

    x1 = ln(x + s2, p["g1"], p["bn1"])
    h = jnp.maximum(x1 @ p["w1_t"] + p["b1"], 0.0)
    y = h @ p["w2_t"] + p["b2"]
    x2 = ln(x1 + y, p["g2"], p["bn2"])
    return jnp.transpose(x2, (1, 0, 2))


if __name__ == "__main__":
    S, B = 8, 2  # seq=8, batch=2, d_model=32, nhead=4, dim_feedforward=64
    key = jax.random.PRNGKey(0)
    k_src, k_par = jax.random.split(key)
    src = jax.random.normal(k_src, (S, B, D_MODEL), jnp.float32)
    params = init_params(k_par)

    # Tolerance 5e-3: softmax normalization uses the EUP approximate reciprocal.
    # Case 1: src_mask=None (full self-attention)
    out_full = jax.block_until_ready(transformer_encoder_layer(src, params, None))
    ref_full = _ref_layer(src, params, None)
    assert out_full.shape == (S, B, D_MODEL)
    assert jnp.allclose(out_full, ref_full, atol=5e-3, rtol=5e-3), (
        float(jnp.max(jnp.abs(out_full - ref_full))))

    # Case 2: src_mask=int (TabPFN single_eval_position split)
    out_split = jax.block_until_ready(transformer_encoder_layer(src, params, 4))
    ref_split = _ref_layer(src, params, 4)
    assert out_split.shape == (S, B, D_MODEL)
    assert jnp.allclose(out_split, ref_split, atol=5e-3, rtol=5e-3), (
        float(jnp.max(jnp.abs(out_split - ref_split))))

    print("KERNEL_OK")
</pallas_src>

<mosaic_0001>
module attributes {stable_mosaic.version = 11 : i64} {
  func.func @_fused_layer_kernel(%arg0: i32, %arg1: memref<2x8x32xf32, #tpu.memory_space<vmem>>, %arg2: memref<32x96xf32, #tpu.memory_space<vmem>>, %arg3: memref<1x96xf32, #tpu.memory_space<vmem>>, %arg4: memref<32x32xf32, #tpu.memory_space<vmem>>, %arg5: memref<1x32xf32, #tpu.memory_space<vmem>>, %arg6: memref<32x64xf32, #tpu.memory_space<vmem>>, %arg7: memref<1x64xf32, #tpu.memory_space<vmem>>, %arg8: memref<64x32xf32, #tpu.memory_space<vmem>>, %arg9: memref<1x32xf32, #tpu.memory_space<vmem>>, %arg10: memref<1x32xf32, #tpu.memory_space<vmem>>, %arg11: memref<1x32xf32, #tpu.memory_space<vmem>>, %arg12: memref<1x32xf32, #tpu.memory_space<vmem>>, %arg13: memref<1x32xf32, #tpu.memory_space<vmem>>, %arg14: memref<2x8x32xf32, #tpu.memory_space<vmem>>) attributes {dimension_semantics = [#tpu.dimension_semantics<parallel>], iteration_bounds = array<i64: 1>, scalar_prefetch = 0 : i64, scratch_operands = 0 : i64, tpu.core_type = #tpu.core_type<tc>, window_params = [{transform_indices = @transform_0, window_bounds = array<i64: 2, 8, 32>}, {pipeline_mode = #tpu.pipeline_mode<synchronous>, transform_indices = @transform_1, window_bounds = array<i64: 32, 96>}, {pipeline_mode = #tpu.pipeline_mode<synchronous>, transform_indices = @transform_2, window_bounds = array<i64: 1, 96>}, {pipeline_mode = #tpu.pipeline_mode<synchronous>, transform_indices = @transform_3, window_bounds = array<i64: 32, 32>}, {pipeline_mode = #tpu.pipeline_mode<synchronous>, transform_indices = @transform_4, window_bounds = array<i64: 1, 32>}, {pipeline_mode = #tpu.pipeline_mode<synchronous>, transform_indices = @transform_5, window_bounds = array<i64: 32, 64>}, {pipeline_mode = #tpu.pipeline_mode<synchronous>, transform_indices = @transform_6, window_bounds = array<i64: 1, 64>}, {pipeline_mode = #tpu.pipeline_mode<synchronous>, transform_indices = @transform_7, window_bounds = array<i64: 64, 32>}, {pipeline_mode = #tpu.pipeline_mode<synchronous>, transform_indices = @transform_8, window_bounds = array<i64: 1, 32>}, {pipeline_mode = #tpu.pipeline_mode<synchronous>, transform_indices = @transform_9, window_bounds = array<i64: 1, 32>}, {pipeline_mode = #tpu.pipeline_mode<synchronous>, transform_indices = @transform_10, window_bounds = array<i64: 1, 32>}, {pipeline_mode = #tpu.pipeline_mode<synchronous>, transform_indices = @transform_11, window_bounds = array<i64: 1, 32>}, {pipeline_mode = #tpu.pipeline_mode<synchronous>, transform_indices = @transform_12, window_bounds = array<i64: 1, 32>}, {transform_indices = @transform_13, window_bounds = array<i64: 2, 8, 32>}]} {
    %c0 = arith.constant 0 : index
    %c0_0 = arith.constant 0 : index
    %0 = vector.load %arg2[%c0, %c0_0] : memref<32x96xf32, #tpu.memory_space<vmem>>, vector<32x96xf32>
    %c0_1 = arith.constant 0 : index
    %c0_2 = arith.constant 0 : index
    %1 = vector.load %arg3[%c0_1, %c0_2] : memref<1x96xf32, #tpu.memory_space<vmem>>, vector<1x96xf32>
    %c0_3 = arith.constant 0 : index
    %c0_4 = arith.constant 0 : index
    %2 = vector.load %arg4[%c0_3, %c0_4] : memref<32x32xf32, #tpu.memory_space<vmem>>, vector<32x32xf32>
    %c0_5 = arith.constant 0 : index
    %c0_6 = arith.constant 0 : index
    %3 = vector.load %arg5[%c0_5, %c0_6] : memref<1x32xf32, #tpu.memory_space<vmem>>, vector<1x32xf32>
    %c0_7 = arith.constant 0 : index
    %c0_8 = arith.constant 0 : index
    %4 = vector.load %arg6[%c0_7, %c0_8] : memref<32x64xf32, #tpu.memory_space<vmem>>, vector<32x64xf32>
    %c0_9 = arith.constant 0 : index
    %c0_10 = arith.constant 0 : index
    %5 = vector.load %arg7[%c0_9, %c0_10] : memref<1x64xf32, #tpu.memory_space<vmem>>, vector<1x64xf32>
    %c0_11 = arith.constant 0 : index
    %c0_12 = arith.constant 0 : index
    %6 = vector.load %arg8[%c0_11, %c0_12] : memref<64x32xf32, #tpu.memory_space<vmem>>, vector<64x32xf32>
    %c0_13 = arith.constant 0 : index
    %c0_14 = arith.constant 0 : index
    %7 = vector.load %arg9[%c0_13, %c0_14] : memref<1x32xf32, #tpu.memory_space<vmem>>, vector<1x32xf32>
    %c0_15 = arith.constant 0 : index
    %c0_16 = arith.constant 0 : index
    %8 = vector.load %arg10[%c0_15, %c0_16] : memref<1x32xf32, #tpu.memory_space<vmem>>, vector<1x32xf32>
    %c0_17 = arith.constant 0 : index
    %c0_18 = arith.constant 0 : index
    %9 = vector.load %arg11[%c0_17, %c0_18] : memref<1x32xf32, #tpu.memory_space<vmem>>, vector<1x32xf32>
    %c0_19 = arith.constant 0 : index
    %c0_20 = arith.constant 0 : index
    %10 = vector.load %arg12[%c0_19, %c0_20] : memref<1x32xf32, #tpu.memory_space<vmem>>, vector<1x32xf32>
    %c0_21 = arith.constant 0 : index
    %c0_22 = arith.constant 0 : index
    %11 = vector.load %arg13[%c0_21, %c0_22] : memref<1x32xf32, #tpu.memory_space<vmem>>, vector<1x32xf32>
    %c0_23 = arith.constant 0 : index
    %c0_24 = arith.constant 0 : index
    %c0_25 = arith.constant 0 : index
    %12 = vector.load %arg1[%c0_23, %c0_24, %c0_25] : memref<2x8x32xf32, #tpu.memory_space<vmem>>, vector<1x8x32xf32>
    %13 = vector.shape_cast %12 : vector<1x8x32xf32> to vector<8x32xf32>
    %cst = arith.constant dense<0.000000e+00> : vector<8x96xf32>
    %14 = tpu.matmul %13, %0, %cst {dimension_numbers = #tpu.dot_dimension_numbers<[1], [0], [0], [1], [0, 0, 1, 1], [], []>} : vector<8x32xf32>, vector<32x96xf32>, vector<8x96xf32> -> vector<8x96xf32>
    %15 = vector.broadcast %1 : vector<1x96xf32> to vector<8x96xf32>
    %16 = arith.addf %14, %15 : vector<8x96xf32>
    %17 = vector.extract_strided_slice %16 {offsets = [0, 0], sizes = [8, 32], strides = [1, 1]} : vector<8x96xf32> to vector<8x32xf32>
    %18 = vector.extract_strided_slice %16 {offsets = [0, 32], sizes = [8, 32], strides = [1, 1]} : vector<8x96xf32> to vector<8x32xf32>
    %19 = vector.extract_strided_slice %16 {offsets = [0, 64], sizes = [8, 32], strides = [1, 1]} : vector<8x96xf32> to vector<8x32xf32>
    %20 = vector.extract_strided_slice %17 {offsets = [0, 0], sizes = [8, 8], strides = [1, 1]} : vector<8x32xf32> to vector<8x8xf32>
    %21 = vector.extract_strided_slice %18 {offsets = [0, 0], sizes = [8, 8], strides = [1, 1]} : vector<8x32xf32> to vector<8x8xf32>
    %22 = tpu.transpose %21, [1, 0] : vector<8x8xf32> -> vector<8x8xf32>
    %cst_26 = arith.constant dense<0.000000e+00> : vector<8x8xf32>
    %23 = tpu.matmul %20, %22, %cst_26 {dimension_numbers = #tpu.dot_dimension_numbers<[1], [0], [0], [1], [0, 0, 1, 1], [], []>} : vector<8x8xf32>, vector<8x8xf32>, vector<8x8xf32> -> vector<8x8xf32>
    %cst_27 = arith.constant 0.353553385 : f32
    %24 = vector.broadcast %cst_27 : f32 to vector<8x8xf32>
    %25 = arith.mulf %23, %24 : vector<8x8xf32>
    %cst_28 = arith.constant dense<0xFF800000> : vector<8xf32>
    %26 = vector.multi_reduction <maximumf>, %25, %cst_28 [1] : vector<8x8xf32> to vector<8xf32>
    %27 = vector.shape_cast %26 : vector<8xf32> to vector<8x1xf32>
    %28 = vector.broadcast %27 : vector<8x1xf32> to vector<8x8xf32>
    %29 = arith.subf %25, %28 : vector<8x8xf32>
    %30 = math.exp %29 : vector<8x8xf32>
    %cst_29 = arith.constant dense<0.000000e+00> : vector<8xf32>
    %31 = vector.multi_reduction <add>, %30, %cst_29 [1] : vector<8x8xf32> to vector<8xf32>
    %32 = vector.shape_cast %31 : vector<8xf32> to vector<8x1xf32>
    %33 = tpu.reciprocal %32 {approx = true} : vector<8x1xf32> -> vector<8x1xf32>
    %34 = vector.broadcast %33 : vector<8x1xf32> to vector<8x8xf32>
    %35 = arith.mulf %30, %34 : vector<8x8xf32>
    %36 = vector.extract_strided_slice %19 {offsets = [0, 0], sizes = [8, 8], strides = [1, 1]} : vector<8x32xf32> to vector<8x8xf32>
    %cst_30 = arith.constant dense<0.000000e+00> : vector<8x8xf32>
    %37 = tpu.matmul %35, %36, %cst_30 {dimension_numbers = #tpu.dot_dimension_numbers<[1], [0], [0], [1], [0, 0, 1, 1], [], []>} : vector<8x8xf32>, vector<8x8xf32>, vector<8x8xf32> -> vector<8x8xf32>
    %38 = vector.extract_strided_slice %17 {offsets = [0, 8], sizes = [8, 8], strides = [1, 1]} : vector<8x32xf32> to vector<8x8xf32>
    %39 = vector.extract_strided_slice %18 {offsets = [0, 8], sizes = [8, 8], strides = [1, 1]} : vector<8x32xf32> to vector<8x8xf32>
    %40 = tpu.transpose %39, [1, 0] : vector<8x8xf32> -> vector<8x8xf32>
    %cst_31 = arith.constant dense<0.000000e+00> : vector<8x8xf32>
    %41 = tpu.matmul %38, %40, %cst_31 {dimension_numbers = #tpu.dot_dimension_numbers<[1], [0], [0], [1], [0, 0, 1, 1], [], []>} : vector<8x8xf32>, vector<8x8xf32>, vector<8x8xf32> -> vector<8x8xf32>
    %cst_32 = arith.constant 0.353553385 : f32
    %42 = vector.broadcast %cst_32 : f32 to vector<8x8xf32>
    %43 = arith.mulf %41, %42 : vector<8x8xf32>
    %cst_33 = arith.constant dense<0xFF800000> : vector<8xf32>
    %44 = vector.multi_reduction <maximumf>, %43, %cst_33 [1] : vector<8x8xf32> to vector<8xf32>
    %45 = vector.shape_cast %44 : vector<8xf32> to vector<8x1xf32>
    %46 = vector.broadcast %45 : vector<8x1xf32> to vector<8x8xf32>
    %47 = arith.subf %43, %46 : vector<8x8xf32>
    %48 = math.exp %47 : vector<8x8xf32>
    %cst_34 = arith.constant dense<0.000000e+00> : vector<8xf32>
    %49 = vector.multi_reduction <add>, %48, %cst_34 [1] : vector<8x8xf32> to vector<8xf32>
    %50 = vector.shape_cast %49 : vector<8xf32> to vector<8x1xf32>
    %51 = tpu.reciprocal %50 {approx = true} : vector<8x1xf32> -> vector<8x1xf32>
    %52 = vector.broadcast %51 : vector<8x1xf32> to vector<8x8xf32>
    %53 = arith.mulf %48, %52 : vector<8x8xf32>
    %54 = vector.extract_strided_slice %19 {offsets = [0, 8], sizes = [8, 8], strides = [1, 1]} : vector<8x32xf32> to vector<8x8xf32>
    %cst_35 = arith.constant dense<0.000000e+00> : vector<8x8xf32>
    %55 = tpu.matmul %53, %54, %cst_35 {dimension_numbers = #tpu.dot_dimension_numbers<[1], [0], [0], [1], [0, 0, 1, 1], [], []>} : vector<8x8xf32>, vector<8x8xf32>, vector<8x8xf32> -> vector<8x8xf32>
    %56 = vector.extract_strided_slice %17 {offsets = [0, 16], sizes = [8, 8], strides = [1, 1]} : vector<8x32xf32> to vector<8x8xf32>
    %57 = vector.extract_strided_slice %18 {offsets = [0, 16], sizes = [8, 8], strides = [1, 1]} : vector<8x32xf32> to vector<8x8xf32>
    %58 = tpu.transpose %57, [1, 0] : vector<8x8xf32> -> vector<8x8xf32>
    %cst_36 = arith.constant dense<0.000000e+00> : vector<8x8xf32>
    %59 = tpu.matmul %56, %58, %cst_36 {dimension_numbers = #tpu.dot_dimension_numbers<[1], [0], [0], [1], [0, 0, 1, 1], [], []>} : vector<8x8xf32>, vector<8x8xf32>, vector<8x8xf32> -> vector<8x8xf32>
    %cst_37 = arith.constant 0.353553385 : f32
    %60 = vector.broadcast %cst_37 : f32 to vector<8x8xf32>
    %61 = arith.mulf %59, %60 : vector<8x8xf32>
    %cst_38 = arith.constant dense<0xFF800000> : vector<8xf32>
    %62 = vector.multi_reduction <maximumf>, %61, %cst_38 [1] : vector<8x8xf32> to vector<8xf32>
    %63 = vector.shape_cast %62 : vector<8xf32> to vector<8x1xf32>
    %64 = vector.broadcast %63 : vector<8x1xf32> to vector<8x8xf32>
    %65 = arith.subf %61, %64 : vector<8x8xf32>
    %66 = math.exp %65 : vector<8x8xf32>
    %cst_39 = arith.constant dense<0.000000e+00> : vector<8xf32>
    %67 = vector.multi_reduction <add>, %66, %cst_39 [1] : vector<8x8xf32> to vector<8xf32>
    %68 = vector.shape_cast %67 : vector<8xf32> to vector<8x1xf32>
    %69 = tpu.reciprocal %68 {approx = true} : vector<8x1xf32> -> vector<8x1xf32>
    %70 = vector.broadcast %69 : vector<8x1xf32> to vector<8x8xf32>
    %71 = arith.mulf %66, %70 : vector<8x8xf32>
    %72 = vector.extract_strided_slice %19 {offsets = [0, 16], sizes = [8, 8], strides = [1, 1]} : vector<8x32xf32> to vector<8x8xf32>
    %cst_40 = arith.constant dense<0.000000e+00> : vector<8x8xf32>
    %73 = tpu.matmul %71, %72, %cst_40 {dimension_numbers = #tpu.dot_dimension_numbers<[1], [0], [0], [1], [0, 0, 1, 1], [], []>} : vector<8x8xf32>, vector<8x8xf32>, vector<8x8xf32> -> vector<8x8xf32>
    %74 = vector.extract_strided_slice %17 {offsets = [0, 24], sizes = [8, 8], strides = [1, 1]} : vector<8x32xf32> to vector<8x8xf32>
    %75 = vector.extract_strided_slice %18 {offsets = [0, 24], sizes = [8, 8], strides = [1, 1]} : vector<8x32xf32> to vector<8x8xf32>
    %76 = tpu.transpose %75, [1, 0] : vector<8x8xf32> -> vector<8x8xf32>
    %cst_41 = arith.constant dense<0.000000e+00> : vector<8x8xf32>
    %77 = tpu.matmul %74, %76, %cst_41 {dimension_numbers = #tpu.dot_dimension_numbers<[1], [0], [0], [1], [0, 0, 1, 1], [], []>} : vector<8x8xf32>, vector<8x8xf32>, vector<8x8xf32> -> vector<8x8xf32>
    %cst_42 = arith.constant 0.353553385 : f32
    %78 = vector.broadcast %cst_42 : f32 to vector<8x8xf32>
    %79 = arith.mulf %77, %78 : vector<8x8xf32>
    %cst_43 = arith.constant dense<0xFF800000> : vector<8xf32>
    %80 = vector.multi_reduction <maximumf>, %79, %cst_43 [1] : vector<8x8xf32> to vector<8xf32>
    %81 = vector.shape_cast %80 : vector<8xf32> to vector<8x1xf32>
    %82 = vector.broadcast %81 : vector<8x1xf32> to vector<8x8xf32>
    %83 = arith.subf %79, %82 : vector<8x8xf32>
    %84 = math.exp %83 : vector<8x8xf32>
    %cst_44 = arith.constant dense<0.000000e+00> : vector<8xf32>
    %85 = vector.multi_reduction <add>, %84, %cst_44 [1] : vector<8x8xf32> to vector<8xf32>
    %86 = vector.shape_cast %85 : vector<8xf32> to vector<8x1xf32>
    %87 = tpu.reciprocal %86 {approx = true} : vector<8x1xf32> -> vector<8x1xf32>
    %88 = vector.broadcast %87 : vector<8x1xf32> to vector<8x8xf32>
    %89 = arith.mulf %84, %88 : vector<8x8xf32>
    %90 = vector.extract_strided_slice %19 {offsets = [0, 24], sizes = [8, 8], strides = [1, 1]} : vector<8x32xf32> to vector<8x8xf32>
    %cst_45 = arith.constant dense<0.000000e+00> : vector<8x8xf32>
    %91 = tpu.matmul %89, %90, %cst_45 {dimension_numbers = #tpu.dot_dimension_numbers<[1], [0], [0], [1], [0, 0, 1, 1], [], []>} : vector<8x8xf32>, vector<8x8xf32>, vector<8x8xf32> -> vector<8x8xf32>
    %92 = tpu.concatenate %37, %55, %73, %91 in 1 : vector<8x8xf32>, vector<8x8xf32>, vector<8x8xf32>, vector<8x8xf32> -> vector<8x32xf32>
    %cst_46 = arith.constant dense<0.000000e+00> : vector<8x32xf32>
    %93 = tpu.matmul %92, %2, %cst_46 {dimension_numbers = #tpu.dot_dimension_numbers<[1], [0], [0], [1], [0, 0, 1, 1], [], []>} : vector<8x32xf32>, vector<32x32xf32>, vector<8x32xf32> -> vector<8x32xf32>
    %94 = vector.broadcast %3 : vector<1x32xf32> to vector<8x32xf32>
    %95 = arith.addf %93, %94 : vector<8x32xf32>
    %96 = arith.addf %13, %95 : vector<8x32xf32>
    %cst_47 = arith.constant dense<0.000000e+00> : vector<8xf32>
    %97 = vector.multi_reduction <add>, %96, %cst_47 [1] : vector<8x32xf32> to vector<8xf32>
    %98 = vector.shape_cast %97 : vector<8xf32> to vector<8x1xf32>
    %cst_48 = arith.constant 3.200000e+01 : f32
    %99 = vector.broadcast %cst_48 : f32 to vector<8x1xf32>
    %100 = arith.divf %98, %99 : vector<8x1xf32>
    %101 = vector.broadcast %100 : vector<8x1xf32> to vector<8x32xf32>
    %102 = arith.subf %96, %101 : vector<8x32xf32>
    %103 = arith.mulf %102, %102 : vector<8x32xf32>
    %cst_49 = arith.constant dense<0.000000e+00> : vector<8xf32>
    %104 = vector.multi_reduction <add>, %103, %cst_49 [1] : vector<8x32xf32> to vector<8xf32>
    %105 = vector.shape_cast %104 : vector<8xf32> to vector<8x1xf32>
    %cst_50 = arith.constant 3.200000e+01 : f32
    %106 = vector.broadcast %cst_50 : f32 to vector<8x1xf32>
    %107 = arith.divf %105, %106 : vector<8x1xf32>
    %108 = vector.broadcast %100 : vector<8x1xf32> to vector<8x32xf32>
    %109 = arith.subf %96, %108 : vector<8x32xf32>
    %cst_51 = arith.constant 9.99999974E-6 : f32
    %110 = vector.broadcast %cst_51 : f32 to vector<8x1xf32>
    %111 = arith.addf %107, %110 : vector<8x1xf32>
    %112 = math.rsqrt %111 : vector<8x1xf32>
    %113 = vector.broadcast %112 : vector<8x1xf32> to vector<8x32xf32>
    %114 = arith.mulf %109, %113 : vector<8x32xf32>
    %115 = vector.broadcast %8 : vector<1x32xf32> to vector<8x32xf32>
    %116 = arith.mulf %114, %115 : vector<8x32xf32>
    %117 = vector.broadcast %9 : vector<1x32xf32> to vector<8x32xf32>
    %118 = arith.addf %116, %117 : vector<8x32xf32>
    %cst_52 = arith.constant dense<0.000000e+00> : vector<8x64xf32>
    %119 = tpu.matmul %118, %4, %cst_52 {dimension_numbers = #tpu.dot_dimension_numbers<[1], [0], [0], [1], [0, 0, 1, 1], [], []>} : vector<8x32xf32>, vector<32x64xf32>, vector<8x64xf32> -> vector<8x64xf32>
    %120 = vector.broadcast %5 : vector<1x64xf32> to vector<8x64xf32>
    %121 = arith.addf %119, %120 : vector<8x64xf32>
    %cst_53 = arith.constant 0.000000e+00 : f32
    %122 = vector.broadcast %cst_53 : f32 to vector<8x64xf32>
    %123 = arith.maximumf %121, %122 : vector<8x64xf32>
    %cst_54 = arith.constant dense<0.000000e+00> : vector<8x32xf32>
    %124 = tpu.matmul %123, %6, %cst_54 {dimension_numbers = #tpu.dot_dimension_numbers<[1], [0], [0], [1], [0, 0, 1, 1], [], []>} : vector<8x64xf32>, vector<64x32xf32>, vector<8x32xf32> -> vector<8x32xf32>
    %125 = vector.broadcast %7 : vector<1x32xf32> to vector<8x32xf32>
    %126 = arith.addf %124, %125 : vector<8x32xf32>
    %127 = arith.addf %118, %126 : vector<8x32xf32>
    %cst_55 = arith.constant dense<0.000000e+00> : vector<8xf32>
    %128 = vector.multi_reduction <add>, %127, %cst_55 [1] : vector<8x32xf32> to vector<8xf32>
    %129 = vector.shape_cast %128 : vector<8xf32> to vector<8x1xf32>
    %cst_56 = arith.constant 3.200000e+01 : f32
    %130 = vector.broadcast %cst_56 : f32 to vector<8x1xf32>
    %131 = arith.divf %129, %130 : vector<8x1xf32>
    %132 = vector.broadcast %131 : vector<8x1xf32> to vector<8x32xf32>
    %133 = arith.subf %127, %132 : vector<8x32xf32>
    %134 = arith.mulf %133, %133 : vector<8x32xf32>
    %cst_57 = arith.constant dense<0.000000e+00> : vector<8xf32>
    %135 = vector.multi_reduction <add>, %134, %cst_57 [1] : vector<8x32xf32> to vector<8xf32>
    %136 = vector.shape_cast %135 : vector<8xf32> to vector<8x1xf32>
    %cst_58 = arith.constant 3.200000e+01 : f32
    %137 = vector.broadcast %cst_58 : f32 to vector<8x1xf32>
    %138 = arith.divf %136, %137 : vector<8x1xf32>
    %139 = vector.broadcast %131 : vector<8x1xf32> to vector<8x32xf32>
    %140 = arith.subf %127, %139 : vector<8x32xf32>
    %cst_59 = arith.constant 9.99999974E-6 : f32
    %141 = vector.broadcast %cst_59 : f32 to vector<8x1xf32>
    %142 = arith.addf %138, %141 : vector<8x1xf32>
    %143 = math.rsqrt %142 : vector<8x1xf32>
    %144 = vector.broadcast %143 : vector<8x1xf32> to vector<8x32xf32>
    %145 = arith.mulf %140, %144 : vector<8x32xf32>
    %146 = vector.broadcast %10 : vector<1x32xf32> to vector<8x32xf32>
    %147 = arith.mulf %145, %146 : vector<8x32xf32>
    %148 = vector.broadcast %11 : vector<1x32xf32> to vector<8x32xf32>
    %149 = arith.addf %147, %148 : vector<8x32xf32>
    %c0_60 = arith.constant 0 : index
    %c0_61 = arith.constant 0 : index
    %c0_62 = arith.constant 0 : index
    %150 = vector.load %arg14[%c0_60, %c0_61, %c0_62] : memref<2x8x32xf32, #tpu.memory_space<vmem>>, vector<1x8x32xf32>
    %151 = vector.shape_cast %150 : vector<1x8x32xf32> to vector<8x32xf32>
    %152 = vector.shape_cast %149 : vector<8x32xf32> to vector<1x8x32xf32>
    tpu.vector_store %arg14[%c0_60, %c0_61, %c0_62], %152 {strides = array<i32>} : memref<2x8x32xf32, #tpu.memory_space<vmem>>, vector<1x8x32xf32>,
    %c1 = arith.constant 1 : index
    %c0_63 = arith.constant 0 : index
    %c0_64 = arith.constant 0 : index
    %153 = vector.load %arg1[%c1, %c0_63, %c0_64] : memref<2x8x32xf32, #tpu.memory_space<vmem>>, vector<1x8x32xf32>
    %154 = vector.shape_cast %153 : vector<1x8x32xf32> to vector<8x32xf32>
    %cst_65 = arith.constant dense<0.000000e+00> : vector<8x96xf32>
    %155 = tpu.matmul %154, %0, %cst_65 {dimension_numbers = #tpu.dot_dimension_numbers<[1], [0], [0], [1], [0, 0, 1, 1], [], []>} : vector<8x32xf32>, vector<32x96xf32>, vector<8x96xf32> -> vector<8x96xf32>
    %156 = vector.broadcast %1 : vector<1x96xf32> to vector<8x96xf32>
    %157 = arith.addf %155, %156 : vector<8x96xf32>
    %158 = vector.extract_strided_slice %157 {offsets = [0, 0], sizes = [8, 32], strides = [1, 1]} : vector<8x96xf32> to vector<8x32xf32>
    %159 = vector.extract_strided_slice %157 {offsets = [0, 32], sizes = [8, 32], strides = [1, 1]} : vector<8x96xf32> to vector<8x32xf32>
    %160 = vector.extract_strided_slice %157 {offsets = [0, 64], sizes = [8, 32], strides = [1, 1]} : vector<8x96xf32> to vector<8x32xf32>
    %161 = vector.extract_strided_slice %158 {offsets = [0, 0], sizes = [8, 8], strides = [1, 1]} : vector<8x32xf32> to vector<8x8xf32>
    %162 = vector.extract_strided_slice %159 {offsets = [0, 0], sizes = [8, 8], strides = [1, 1]} : vector<8x32xf32> to vector<8x8xf32>
    %163 = tpu.transpose %162, [1, 0] : vector<8x8xf32> -> vector<8x8xf32>
    %cst_66 = arith.constant dense<0.000000e+00> : vector<8x8xf32>
    %164 = tpu.matmul %161, %163, %cst_66 {dimension_numbers = #tpu.dot_dimension_numbers<[1], [0], [0], [1], [0, 0, 1, 1], [], []>} : vector<8x8xf32>, vector<8x8xf32>, vector<8x8xf32> -> vector<8x8xf32>
    %cst_67 = arith.constant 0.353553385 : f32
    %165 = vector.broadcast %cst_67 : f32 to vector<8x8xf32>
    %166 = arith.mulf %164, %165 : vector<8x8xf32>
    %cst_68 = arith.constant dense<0xFF800000> : vector<8xf32>
    %167 = vector.multi_reduction <maximumf>, %166, %cst_68 [1] : vector<8x8xf32> to vector<8xf32>
    %168 = vector.shape_cast %167 : vector<8xf32> to vector<8x1xf32>
    %169 = vector.broadcast %168 : vector<8x1xf32> to vector<8x8xf32>
    %170 = arith.subf %166, %169 : vector<8x8xf32>
    %171 = math.exp %170 : vector<8x8xf32>
    %cst_69 = arith.constant dense<0.000000e+00> : vector<8xf32>
    %172 = vector.multi_reduction <add>, %171, %cst_69 [1] : vector<8x8xf32> to vector<8xf32>
    %173 = vector.shape_cast %172 : vector<8xf32> to vector<8x1xf32>
    %174 = tpu.reciprocal %173 {approx = true} : vector<8x1xf32> -> vector<8x1xf32>
    %175 = vector.broadcast %174 : vector<8x1xf32> to vector<8x8xf32>
    %176 = arith.mulf %171, %175 : vector<8x8xf32>
    %177 = vector.extract_strided_slice %160 {offsets = [0, 0], sizes = [8, 8], strides = [1, 1]} : vector<8x32xf32> to vector<8x8xf32>
    %cst_70 = arith.constant dense<0.000000e+00> : vector<8x8xf32>
    %178 = tpu.matmul %176, %177, %cst_70 {dimension_numbers = #tpu.dot_dimension_numbers<[1], [0], [0], [1], [0, 0, 1, 1], [], []>} : vector<8x8xf32>, vector<8x8xf32>, vector<8x8xf32> -> vector<8x8xf32>
    %179 = vector.extract_strided_slice %158 {offsets = [0, 8], sizes = [8, 8], strides = [1, 1]} : vector<8x32xf32> to vector<8x8xf32>
    %180 = vector.extract_strided_slice %159 {offsets = [0, 8], sizes = [8, 8], strides = [1, 1]} : vector<8x32xf32> to vector<8x8xf32>
    %181 = tpu.transpose %180, [1, 0] : vector<8x8xf32> -> vector<8x8xf32>
    %cst_71 = arith.constant dense<0.000000e+00> : vector<8x8xf32>
    %182 = tpu.matmul %179, %181, %cst_71 {dimension_numbers = #tpu.dot_dimension_numbers<[1], [0], [0], [1], [0, 0, 1, 1], [], []>} : vector<8x8xf32>, vector<8x8xf32>, vector<8x8xf32> -> vector<8x8xf32>
    %cst_72 = arith.constant 0.353553385 : f32
    %183 = vector.broadcast %cst_72 : f32 to vector<8x8xf32>
    %184 = arith.mulf %182, %183 : vector<8x8xf32>
    %cst_73 = arith.constant dense<0xFF800000> : vector<8xf32>
    %185 = vector.multi_reduction <maximumf>, %184, %cst_73 [1] : vector<8x8xf32> to vector<8xf32>
    %186 = vector.shape_cast %185 : vector<8xf32> to vector<8x1xf32>
    %187 = vector.broadcast %186 : vector<8x1xf32> to vector<8x8xf32>
    %188 = arith.subf %184, %187 : vector<8x8xf32>
    %189 = math.exp %188 : vector<8x8xf32>
    %cst_74 = arith.constant dense<0.000000e+00> : vector<8xf32>
    %190 = vector.multi_reduction <add>, %189, %cst_74 [1] : vector<8x8xf32> to vector<8xf32>
    %191 = vector.shape_cast %190 : vector<8xf32> to vector<8x1xf32>
    %192 = tpu.reciprocal %191 {approx = true} : vector<8x1xf32> -> vector<8x1xf32>
    %193 = vector.broadcast %192 : vector<8x1xf32> to vector<8x8xf32>
    %194 = arith.mulf %189, %193 : vector<8x8xf32>
    %195 = vector.extract_strided_slice %160 {offsets = [0, 8], sizes = [8, 8], strides = [1, 1]} : vector<8x32xf32> to vector<8x8xf32>
    %cst_75 = arith.constant dense<0.000000e+00> : vector<8x8xf32>
    %196 = tpu.matmul %194, %195, %cst_75 {dimension_numbers = #tpu.dot_dimension_numbers<[1], [0], [0], [1], [0, 0, 1, 1], [], []>} : vector<8x8xf32>, vector<8x8xf32>, vector<8x8xf32> -> vector<8x8xf32>
    %197 = vector.extract_strided_slice %158 {offsets = [0, 16], sizes = [8, 8], strides = [1, 1]} : vector<8x32xf32> to vector<8x8xf32>
    %198 = vector.extract_strided_slice %159 {offsets = [0, 16], sizes = [8, 8], strides = [1, 1]} : vector<8x32xf32> to vector<8x8xf32>
    %199 = tpu.transpose %198, [1, 0] : vector<8x8xf32> -> vector<8x8xf32>
    %cst_76 = arith.constant dense<0.000000e+00> : vector<8x8xf32>
    %200 = tpu.matmul %197, %199, %cst_76 {dimension_numbers = #tpu.dot_dimension_numbers<[1], [0], [0], [1], [0, 0, 1, 1], [], []>} : vector<8x8xf32>, vector<8x8xf32>, vector<8x8xf32> -> vector<8x8xf32>
    %cst_77 = arith.constant 0.353553385 : f32
    %201 = vector.broadcast %cst_77 : f32 to vector<8x8xf32>
    %202 = arith.mulf %200, %201 : vector<8x8xf32>
    %cst_78 = arith.constant dense<0xFF800000> : vector<8xf32>
    %203 = vector.multi_reduction <maximumf>, %202, %cst_78 [1] : vector<8x8xf32> to vector<8xf32>
    %204 = vector.shape_cast %203 : vector<8xf32> to vector<8x1xf32>
    %205 = vector.broadcast %204 : vector<8x1xf32> to vector<8x8xf32>
    %206 = arith.subf %202, %205 : vector<8x8xf32>
    %207 = math.exp %206 : vector<8x8xf32>
    %cst_79 = arith.constant dense<0.000000e+00> : vector<8xf32>
    %208 = vector.multi_reduction <add>, %207, %cst_79 [1] : vector<8x8xf32> to vector<8xf32>
    %209 = vector.shape_cast %208 : vector<8xf32> to vector<8x1xf32>
    %210 = tpu.reciprocal %209 {approx = true} : vector<8x1xf32> -> vector<8x1xf32>
    %211 = vector.broadcast %210 : vector<8x1xf32> to vector<8x8xf32>
    %212 = arith.mulf %207, %211 : vector<8x8xf32>
    %213 = vector.extract_strided_slice %160 {offsets = [0, 16], sizes = [8, 8], strides = [1, 1]} : vector<8x32xf32> to vector<8x8xf32>
    %cst_80 = arith.constant dense<0.000000e+00> : vector<8x8xf32>
    %214 = tpu.matmul %212, %213, %cst_80 {dimension_numbers = #tpu.dot_dimension_numbers<[1], [0], [0], [1], [0, 0, 1, 1], [], []>} : vector<8x8xf32>, vector<8x8xf32>, vector<8x8xf32> -> vector<8x8xf32>
    %215 = vector.extract_strided_slice %158 {offsets = [0, 24], sizes = [8, 8], strides = [1, 1]} : vector<8x32xf32> to vector<8x8xf32>
    %216 = vector.extract_strided_slice %159 {offsets = [0, 24], sizes = [8, 8], strides = [1, 1]} : vector<8x32xf32> to vector<8x8xf32>
    %217 = tpu.transpose %216, [1, 0] : vector<8x8xf32> -> vector<8x8xf32>
    %cst_81 = arith.constant dense<0.000000e+00> : vector<8x8xf32>
    %218 = tpu.matmul %215, %217, %cst_81 {dimension_numbers = #tpu.dot_dimension_numbers<[1], [0], [0], [1], [0, 0, 1, 1], [], []>} : vector<8x8xf32>, vector<8x8xf32>, vector<8x8xf32> -> vector<8x8xf32>
    %cst_82 = arith.constant 0.353553385 : f32
    %219 = vector.broadcast %cst_82 : f32 to vector<8x8xf32>
    %220 = arith.mulf %218, %219 : vector<8x8xf32>
    %cst_83 = arith.constant dense<0xFF800000> : vector<8xf32>
    %221 = vector.multi_reduction <maximumf>, %220, %cst_83 [1] : vector<8x8xf32> to vector<8xf32>
    %222 = vector.shape_cast %221 : vector<8xf32> to vector<8x1xf32>
    %223 = vector.broadcast %222 : vector<8x1xf32> to vector<8x8xf32>
    %224 = arith.subf %220, %223 : vector<8x8xf32>
    %225 = math.exp %224 : vector<8x8xf32>
    %cst_84 = arith.constant dense<0.000000e+00> : vector<8xf32>
    %226 = vector.multi_reduction <add>, %225, %cst_84 [1] : vector<8x8xf32> to vector<8xf32>
    %227 = vector.shape_cast %226 : vector<8xf32> to vector<8x1xf32>
    %228 = tpu.reciprocal %227 {approx = true} : vector<8x1xf32> -> vector<8x1xf32>
    %229 = vector.broadcast %228 : vector<8x1xf32> to vector<8x8xf32>
    %230 = arith.mulf %225, %229 : vector<8x8xf32>
    %231 = vector.extract_strided_slice %160 {offsets = [0, 24], sizes = [8, 8], strides = [1, 1]} : vector<8x32xf32> to vector<8x8xf32>
    %cst_85 = arith.constant dense<0.000000e+00> : vector<8x8xf32>
    %232 = tpu.matmul %230, %231, %cst_85 {dimension_numbers = #tpu.dot_dimension_numbers<[1], [0], [0], [1], [0, 0, 1, 1], [], []>} : vector<8x8xf32>, vector<8x8xf32>, vector<8x8xf32> -> vector<8x8xf32>
    %233 = tpu.concatenate %178, %196, %214, %232 in 1 : vector<8x8xf32>, vector<8x8xf32>, vector<8x8xf32>, vector<8x8xf32> -> vector<8x32xf32>
    %cst_86 = arith.constant dense<0.000000e+00> : vector<8x32xf32>
    %234 = tpu.matmul %233, %2, %cst_86 {dimension_numbers = #tpu.dot_dimension_numbers<[1], [0], [0], [1], [0, 0, 1, 1], [], []>} : vector<8x32xf32>, vector<32x32xf32>, vector<8x32xf32> -> vector<8x32xf32>
    %235 = vector.broadcast %3 : vector<1x32xf32> to vector<8x32xf32>
    %236 = arith.addf %234, %235 : vector<8x32xf32>
    %237 = arith.addf %154, %236 : vector<8x32xf32>
    %cst_87 = arith.constant dense<0.000000e+00> : vector<8xf32>
    %238 = vector.multi_reduction <add>, %237, %cst_87 [1] : vector<8x32xf32> to vector<8xf32>
    %239 = vector.shape_cast %238 : vector<8xf32> to vector<8x1xf32>
    %cst_88 = arith.constant 3.200000e+01 : f32
    %240 = vector.broadcast %cst_88 : f32 to vector<8x1xf32>
    %241 = arith.divf %239, %240 : vector<8x1xf32>
    %242 = vector.broadcast %241 : vector<8x1xf32> to vector<8x32xf32>
    %243 = arith.subf %237, %242 : vector<8x32xf32>
    %244 = arith.mulf %243, %243 : vector<8x32xf32>
    %cst_89 = arith.constant dense<0.000000e+00> : vector<8xf32>
    %245 = vector.multi_reduction <add>, %244, %cst_89 [1] : vector<8x32xf32> to vector<8xf32>
    %246 = vector.shape_cast %245 : vector<8xf32> to vector<8x1xf32>
    %cst_90 = arith.constant 3.200000e+01 : f32
    %247 = vector.broadcast %cst_90 : f32 to vector<8x1xf32>
    %248 = arith.divf %246, %247 : vector<8x1xf32>
    %249 = vector.broadcast %241 : vector<8x1xf32> to vector<8x32xf32>
    %250 = arith.subf %237, %249 : vector<8x32xf32>
    %cst_91 = arith.constant 9.99999974E-6 : f32
    %251 = vector.broadcast %cst_91 : f32 to vector<8x1xf32>
    %252 = arith.addf %248, %251 : vector<8x1xf32>
    %253 = math.rsqrt %252 : vector<8x1xf32>
    %254 = vector.broadcast %253 : vector<8x1xf32> to vector<8x32xf32>
    %255 = arith.mulf %250, %254 : vector<8x32xf32>
    %256 = vector.broadcast %8 : vector<1x32xf32> to vector<8x32xf32>
    %257 = arith.mulf %255, %256 : vector<8x32xf32>
    %258 = vector.broadcast %9 : vector<1x32xf32> to vector<8x32xf32>
    %259 = arith.addf %257, %258 : vector<8x32xf32>
    %cst_92 = arith.constant dense<0.000000e+00> : vector<8x64xf32>
    %260 = tpu.matmul %259, %4, %cst_92 {dimension_numbers = #tpu.dot_dimension_numbers<[1], [0], [0], [1], [0, 0, 1, 1], [], []>} : vector<8x32xf32>, vector<32x64xf32>, vector<8x64xf32> -> vector<8x64xf32>
    %261 = vector.broadcast %5 : vector<1x64xf32> to vector<8x64xf32>
    %262 = arith.addf %260, %261 : vector<8x64xf32>
    %cst_93 = arith.constant 0.000000e+00 : f32
    %263 = vector.broadcast %cst_93 : f32 to vector<8x64xf32>
    %264 = arith.maximumf %262, %263 : vector<8x64xf32>
    %cst_94 = arith.constant dense<0.000000e+00> : vector<8x32xf32>
    %265 = tpu.matmul %264, %6, %cst_94 {dimension_numbers = #tpu.dot_dimension_numbers<[1], [0], [0], [1], [0, 0, 1, 1], [], []>} : vector<8x64xf32>, vector<64x32xf32>, vector<8x32xf32> -> vector<8x32xf32>
    %266 = vector.broadcast %7 : vector<1x32xf32> to vector<8x32xf32>
    %267 = arith.addf %265, %266 : vector<8x32xf32>
    %268 = arith.addf %259, %267 : vector<8x32xf32>
    %cst_95 = arith.constant dense<0.000000e+00> : vector<8xf32>
    %269 = vector.multi_reduction <add>, %268, %cst_95 [1] : vector<8x32xf32> to vector<8xf32>
    %270 = vector.shape_cast %269 : vector<8xf32> to vector<8x1xf32>
    %cst_96 = arith.constant 3.200000e+01 : f32
    %271 = vector.broadcast %cst_96 : f32 to vector<8x1xf32>
    %272 = arith.divf %270, %271 : vector<8x1xf32>
    %273 = vector.broadcast %272 : vector<8x1xf32> to vector<8x32xf32>
    %274 = arith.subf %268, %273 : vector<8x32xf32>
    %275 = arith.mulf %274, %274 : vector<8x32xf32>
    %cst_97 = arith.constant dense<0.000000e+00> : vector<8xf32>
    %276 = vector.multi_reduction <add>, %275, %cst_97 [1] : vector<8x32xf32> to vector<8xf32>
    %277 = vector.shape_cast %276 : vector<8xf32> to vector<8x1xf32>
    %cst_98 = arith.constant 3.200000e+01 : f32
    %278 = vector.broadcast %cst_98 : f32 to vector<8x1xf32>
    %279 = arith.divf %277, %278 : vector<8x1xf32>
    %280 = vector.broadcast %272 : vector<8x1xf32> to vector<8x32xf32>
    %281 = arith.subf %268, %280 : vector<8x32xf32>
    %cst_99 = arith.constant 9.99999974E-6 : f32
    %282 = vector.broadcast %cst_99 : f32 to vector<8x1xf32>
    %283 = arith.addf %279, %282 : vector<8x1xf32>
    %284 = math.rsqrt %283 : vector<8x1xf32>
    %285 = vector.broadcast %284 : vector<8x1xf32> to vector<8x32xf32>
    %286 = arith.mulf %281, %285 : vector<8x32xf32>
    %287 = vector.broadcast %10 : vector<1x32xf32> to vector<8x32xf32>
    %288 = arith.mulf %286, %287 : vector<8x32xf32>
    %289 = vector.broadcast %11 : vector<1x32xf32> to vector<8x32xf32>
    %290 = arith.addf %288, %289 : vector<8x32xf32>
    %c1_100 = arith.constant 1 : index
    %c0_101 = arith.constant 0 : index
    %c0_102 = arith.constant 0 : index
    %291 = vector.load %arg14[%c1_100, %c0_101, %c0_102] : memref<2x8x32xf32, #tpu.memory_space<vmem>>, vector<1x8x32xf32>
    %292 = vector.shape_cast %291 : vector<1x8x32xf32> to vector<8x32xf32>
    %293 = vector.shape_cast %290 : vector<8x32xf32> to vector<1x8x32xf32>
    tpu.vector_store %arg14[%c1_100, %c0_101, %c0_102], %293 {strides = array<i32>} : memref<2x8x32xf32, #tpu.memory_space<vmem>>, vector<1x8x32xf32>,
    return
  }
  func.func @transform_0(%arg0: i32) -> (i32, i32, i32) {
    %c0_i32 = arith.constant 0 : i32
    %c0_i32_0 = arith.constant 0 : i32
    %c0_i32_1 = arith.constant 0 : i32
    return %arg0, %c0_i32, %c0_i32_0 : i32, i32, i32
  }
  func.func @transform_1(%arg0: i32) -> (i32, i32) {
    %c0_i32 = arith.constant 0 : i32
    %c0_i32_0 = arith.constant 0 : i32
    %c0_i32_1 = arith.constant 0 : i32
    return %c0_i32, %c0_i32_0 : i32, i32
  }
  func.func @transform_2(%arg0: i32) -> (i32, i32) {
    %c0_i32 = arith.constant 0 : i32
    %c0_i32_0 = arith.constant 0 : i32
    %c0_i32_1 = arith.constant 0 : i32
    return %c0_i32, %c0_i32_0 : i32, i32
  }
  func.func @transform_3(%arg0: i32) -> (i32, i32) {
    %c0_i32 = arith.constant 0 : i32
    %c0_i32_0 = arith.constant 0 : i32
    %c0_i32_1 = arith.constant 0 : i32
    return %c0_i32, %c0_i32_0 : i32, i32
  }
  func.func @transform_4(%arg0: i32) -> (i32, i32) {
    %c0_i32 = arith.constant 0 : i32
    %c0_i32_0 = arith.constant 0 : i32
    %c0_i32_1 = arith.constant 0 : i32
    return %c0_i32, %c0_i32_0 : i32, i32
  }
  func.func @transform_5(%arg0: i32) -> (i32, i32) {
    %c0_i32 = arith.constant 0 : i32
    %c0_i32_0 = arith.constant 0 : i32
    %c0_i32_1 = arith.constant 0 : i32
    return %c0_i32, %c0_i32_0 : i32, i32
  }
  func.func @transform_6(%arg0: i32) -> (i32, i32) {
    %c0_i32 = arith.constant 0 : i32
    %c0_i32_0 = arith.constant 0 : i32
    %c0_i32_1 = arith.constant 0 : i32
    return %c0_i32, %c0_i32_0 : i32, i32
  }
  func.func @transform_7(%arg0: i32) -> (i32, i32) {
    %c0_i32 = arith.constant 0 : i32
    %c0_i32_0 = arith.constant 0 : i32
    %c0_i32_1 = arith.constant 0 : i32
    return %c0_i32, %c0_i32_0 : i32, i32
  }
  func.func @transform_8(%arg0: i32) -> (i32, i32) {
    %c0_i32 = arith.constant 0 : i32
    %c0_i32_0 = arith.constant 0 : i32
    %c0_i32_1 = arith.constant 0 : i32
    return %c0_i32, %c0_i32_0 : i32, i32
  }
  func.func @transform_9(%arg0: i32) -> (i32, i32) {
    %c0_i32 = arith.constant 0 : i32
    %c0_i32_0 = arith.constant 0 : i32
    %c0_i32_1 = arith.constant 0 : i32
    return %c0_i32, %c0_i32_0 : i32, i32
  }
  func.func @transform_10(%arg0: i32) -> (i32, i32) {
    %c0_i32 = arith.constant 0 : i32
    %c0_i32_0 = arith.constant 0 : i32
    %c0_i32_1 = arith.constant 0 : i32
    return %c0_i32, %c0_i32_0 : i32, i32
  }
  func.func @transform_11(%arg0: i32) -> (i32, i32) {
    %c0_i32 = arith.constant 0 : i32
    %c0_i32_0 = arith.constant 0 : i32
    %c0_i32_1 = arith.constant 0 : i32
    return %c0_i32, %c0_i32_0 : i32, i32
  }
  func.func @transform_12(%arg0: i32) -> (i32, i32) {
    %c0_i32 = arith.constant 0 : i32
    %c0_i32_0 = arith.constant 0 : i32
    %c0_i32_1 = arith.constant 0 : i32
    return %c0_i32, %c0_i32_0 : i32, i32
  }
  func.func @transform_13(%arg0: i32) -> (i32, i32, i32) {
    %c0_i32 = arith.constant 0 : i32
    %c0_i32_0 = arith.constant 0 : i32
    %c0_i32_1 = arith.constant 0 : i32
    return %arg0, %c0_i32, %c0_i32_0 : i32, i32, i32
  }
}

</mosaic_0001>

<llo_original>
// kernel: tpu_custom_call.1
$region0: #{tpu_custom_call.1}
  #allocation0 [shape = 'u32[]', space=smem, size = 0x4, offset = 0x4, fixed_abs, tag = 'smem constant byte address 0x4 - core index']
  #allocation1 [shape = 'u32[144,128]{1,0:T(1,128)}', space=vmem, size = 0x12000, scoped, tag = 'internal scratch']
  %s0 = inlined_call_operand.hbm [shape: f32[2,8,32], index: 0, kind: input, shape index: {}]
  %s1 = inlined_call_operand.vmem [shape: f32[32,96], index: 1, kind: input, shape index: {}]
  %s2 = inlined_call_operand.vmem [shape: f32[1,96], index: 2, kind: input, shape index: {}]
  %s3 = inlined_call_operand.vmem [shape: f32[32,32], index: 3, kind: input, shape index: {}]
  %s4 = inlined_call_operand.vmem [shape: f32[1,32], index: 4, kind: input, shape index: {}]
  %s5 = inlined_call_operand.vmem [shape: f32[32,64], index: 5, kind: input, shape index: {}]
  %s6 = inlined_call_operand.vmem [shape: f32[1,64], index: 6, kind: input, shape index: {}]
  %s7 = inlined_call_operand.vmem [shape: f32[64,32], index: 7, kind: input, shape index: {}]
  %s8 = inlined_call_operand.vmem [shape: f32[1,32], index: 8, kind: input, shape index: {}]
  %s9 = inlined_call_operand.vmem [shape: f32[1,32], index: 9, kind: input, shape index: {}]
  %s10 = inlined_call_operand.vmem [shape: f32[1,32], index: 10, kind: input, shape index: {}]
  %s11 = inlined_call_operand.vmem [shape: f32[1,32], index: 11, kind: input, shape index: {}]
  %s12 = inlined_call_operand.vmem [shape: f32[1,32], index: 12, kind: input, shape index: {}]
  %s13 = inlined_call_operand.hbm [shape: f32[2,8,32], index: 13, kind: output, shape index: {}]
  %s14 = sld [smem:[#allocation0]]
  $region66: #{tpu_custom_call.1} parent=0
    _
  %s16 = ssub.s32 1, %s14
  %s17 = scalar_select 0, %s16, %s14
  $region1: #{tpu_custom_call.1} parent=0
    #allocation2 [shape = 'u8[8192]{0}', space=vmem, size = 0x2000, scoped, tag = 'input window, operand 0, single buffered']
    #allocation3 [shape = 's32[1]{0}', space=sflag, size = 0x4, scoped, tag = 'scoped memory for tpu_custom_call.1']
    #allocation4 [shape = 's32[1]{0}', space=sflag, size = 0x4, scoped, tag = 'scoped memory for tpu_custom_call.1']
    #allocation5 [shape = 'u8[8192]{0}', space=vmem, size = 0x2000, scoped, tag = 'output window, operand 0, single buffered']
    %18 = vsyncpa [#allocation3], 0
    %19 = vsyncpa [#allocation4], 0
    // Predicated region
    $region2: #{tpu_custom_call.1} parent=1 // pred_check
      _
    $region3: #{tpu_custom_call.1} parent=1 // pred_check_branch
      %21 = sbr.rel (0) target = $region5
    $region4: #{tpu_custom_call.1} parent=1 // pred_region
      %s23 = ssub.s32 256, 256
      %24 = vsyncadd [#allocation3], %s23
      %s25 = sshll.u32 [#allocation2], 4
      %s26 = int_to_ptr.vmem [resolvable:$true] %s25
      %31 = dma.hbm_to_vmem [thread:$0]  %s0, 256, %s26, [#allocation3], 128, 128, 8
    $region5: #{tpu_custom_call.1} parent=1 // pred_fallthru
      _
    // Predicated region
    $region6: #{tpu_custom_call.1} parent=1 // pred_check
      _
    $region7: #{tpu_custom_call.1} parent=1 // pred_check_branch
      %33 = sbr.rel (0) target = $region9
    $region8: #{tpu_custom_call.1} parent=1 // pred_region
      _
    $region9: #{tpu_custom_call.1} parent=1 // pred_fallthru
      _
    // Predicated region
    $region10: #{tpu_custom_call.1} parent=1 // pred_check
      _
    $region11: #{tpu_custom_call.1} parent=1 // pred_check_branch
      %35 = sbr.rel (0) target = $region13
    $region12: #{tpu_custom_call.1} parent=1 // pred_region
      _
    $region13: #{tpu_custom_call.1} parent=1 // pred_fallthru
      _
    // Predicated region
    $region14: #{tpu_custom_call.1} parent=1 // pred_check
      _
    $region15: #{tpu_custom_call.1} parent=1 // pred_check_branch
      %37 = sbr.rel (0) target = $region17
    $region16: #{tpu_custom_call.1} parent=1 // pred_region
      _
    $region17: #{tpu_custom_call.1} parent=1 // pred_fallthru
      _
    // Predicated region
    $region18: #{tpu_custom_call.1} parent=1 // pred_check
      _
    $region19: #{tpu_custom_call.1} parent=1 // pred_check_branch
      %39 = sbr.rel (0) target = $region21
    $region20: #{tpu_custom_call.1} parent=1 // pred_region
      _
    $region21: #{tpu_custom_call.1} parent=1 // pred_fallthru
      _
    // Predicated region
    $region22: #{tpu_custom_call.1} parent=1 // pred_check
      _
    $region23: #{tpu_custom_call.1} parent=1 // pred_check_branch
      %41 = sbr.rel (0) target = $region25
    $region24: #{tpu_custom_call.1} parent=1 // pred_region
      _
    $region25: #{tpu_custom_call.1} parent=1 // pred_fallthru
      _
    // Predicated region
    $region26: #{tpu_custom_call.1} parent=1 // pred_check
      _
    $region27: #{tpu_custom_call.1} parent=1 // pred_check_branch
      %43 = sbr.rel (0) target = $region29
    $region28: #{tpu_custom_call.1} parent=1 // pred_region
      _
    $region29: #{tpu_custom_call.1} parent=1 // pred_fallthru
      _
    // Predicated region
    $region30: #{tpu_custom_call.1} parent=1 // pred_check
      _
    $region31: #{tpu_custom_call.1} parent=1 // pred_check_branch
      %45 = sbr.rel (0) target = $region33
    $region32: #{tpu_custom_call.1} parent=1 // pred_region
      _
    $region33: #{tpu_custom_call.1} parent=1 // pred_fallthru
      _
    // Predicated region
    $region34: #{tpu_custom_call.1} parent=1 // pred_check
      _
    $region35: #{tpu_custom_call.1} parent=1 // pred_check_branch
      %47 = sbr.rel (0) target = $region37
    $region36: #{tpu_custom_call.1} parent=1 // pred_region
      _
    $region37: #{tpu_custom_call.1} parent=1 // pred_fallthru
      _
    // Predicated region
    $region38: #{tpu_custom_call.1} parent=1 // pred_check
      _
    $region39: #{tpu_custom_call.1} parent=1 // pred_check_branch
      %49 = sbr.rel (0) target = $region41
    $region40: #{tpu_custom_call.1} parent=1 // pred_region
      _
    $region41: #{tpu_custom_call.1} parent=1 // pred_fallthru
      _
    // Predicated region
    $region42: #{tpu_custom_call.1} parent=1 // pred_check
      _
    $region43: #{tpu_custom_call.1} parent=1 // pred_check_branch
      %51 = sbr.rel (0) target = $region45
    $region44: #{tpu_custom_call.1} parent=1 // pred_region
      _
    $region45: #{tpu_custom_call.1} parent=1 // pred_fallthru
      _
    // Predicated region
    $region46: #{tpu_custom_call.1} parent=1 // pred_check
      _
    $region47: #{tpu_custom_call.1} parent=1 // pred_check_branch
      %53 = sbr.rel (0) target = $region49
    $region48: #{tpu_custom_call.1} parent=1 // pred_region
      _
    $region49: #{tpu_custom_call.1} parent=1 // pred_fallthru
      _
    // Predicated region
    $region50: #{tpu_custom_call.1} parent=1 // pred_check
      _
    $region51: #{tpu_custom_call.1} parent=1 // pred_check_branch
      %55 = sbr.rel (0) target = $region53
    $region52: #{tpu_custom_call.1} parent=1 // pred_region
      _
    $region53: #{tpu_custom_call.1} parent=1 // pred_fallthru
      _
    // Predicated region
    $region54: #{tpu_custom_call.1} parent=1 // pred_check
      _
    $region55: #{tpu_custom_call.1} parent=1 // pred_check_branch
      %57 = sbr.rel (0) target = $region57
    $region56: #{tpu_custom_call.1} parent=1 // pred_region
      %58 = dma.done [#allocation3], 256
    $region57: #{tpu_custom_call.1} parent=1 // pred_fallthru
      _
    %v59 = vld [vmem:[%s1] sm:$0xff]
    %v60 = vld [vmem:[%s1 + $0x8] sm:$0xff]
    %v61 = vld [vmem:[%s1 + $0x10] sm:$0xff]
    %v62 = vld [vmem:[%s1 + $0x18] sm:$0xff]
    %v63 = vld [vmem:[%s2] sm:$0x1]
    %v64 = vld [vmem:[%s3] sm:$0xff]
    %v65 = vld [vmem:[%s3 + $0x8] sm:$0xff]
    %v66 = vld [vmem:[%s3 + $0x10] sm:$0xff]
    %v67 = vld [vmem:[%s3 + $0x18] sm:$0xff]
    %v68 = vld [vmem:[%s4] sm:$0x1]
    %v69 = vld [vmem:[%s5] sm:$0xff]
    %v70 = vld [vmem:[%s5 + $0x8] sm:$0xff]
    %v71 = vld [vmem:[%s5 + $0x10] sm:$0xff]
    %v72 = vld [vmem:[%s5 + $0x18] sm:$0xff]
    %v73 = vld [vmem:[%s6] sm:$0x1]
    %v74 = vld [vmem:[%s7] sm:$0xff]
    %v75 = vld [vmem:[%s7 + $0x8] sm:$0xff]
    %v76 = vld [vmem:[%s7 + $0x10] sm:$0xff]
    %v77 = vld [vmem:[%s7 + $0x18] sm:$0xff]
    %v78 = vld [vmem:[%s7 + $0x20] sm:$0xff]
    %v79 = vld [vmem:[%s7 + $0x28] sm:$0xff]
    %v80 = vld [vmem:[%s7 + $0x30] sm:$0xff]
    %v81 = vld [vmem:[%s7 + $0x38] sm:$0xff]
    %v82 = vld [vmem:[%s8] sm:$0x1]
    %v83 = vld [vmem:[%s9] sm:$0x1]
    %v84 = vld [vmem:[%s10] sm:$0x1]
    %v85 = vld [vmem:[%s11] sm:$0x1]
    %v86 = vld [vmem:[%s12] sm:$0x1]
    %v87 = vld [vmem:[#allocation2] sm:$0xff]
    %v89 = vlaneseq
    %v90 = vshrl.u32 %v89, 7
    %v91 = vsub.s32 0, %v90
    %v92 = vrot.slane %v63, %v91
    %vm94 = vcmask 261120
    %v96 = vsel %vm94, %v87, 0
    %98 = vmatprep.subr.mxu0 0.0
    %99 = vmatpush1.msra.mxu0 %v59
    %100 = vmatprep.subr.mxu0 0.0
    %101 = vmatpush1.msra.mxu0 %v60
    %102 = vmatprep.subr.mxu0 0.0
    %103 = vmatpush1.msra.mxu0 %v61
    %104 = vmatprep.subr.mxu0 0.0
    %105 = vmatpush1.msra.mxu0 %v62
    %106 = vmatprep.subr.mxu0 0.0
    %107 = vmatpush1.msra.mxu0 0.0
    %108 = vmatprep.subr.mxu0 0.0
    %109 = vmatpush1.msra.mxu0 0.0
    %110 = vmatprep.subr.mxu0 0.0
    %111 = vmatpush1.msra.mxu0 0.0
    %112 = vmatprep.subr.mxu0 0.0
    %113 = vmatpush1.msra.mxu0 0.0
    %114 = vmatprep.subr.mxu0 0.0
    %115 = vmatpush1.msra.mxu0 0.0
    %116 = vmatprep.subr.mxu0 0.0
    %117 = vmatpush1.msra.mxu0 0.0
    %118 = vmatprep.subr.mxu0 0.0
    %119 = vmatpush1.msra.mxu0 0.0
    %120 = vmatprep.subr.mxu0 0.0
    %121 = vmatpush1.msra.mxu0 0.0
    %122 = vmatprep.subr.mxu0 0.0
    %123 = vmatpush1.msra.mxu0 0.0
    %124 = vmatprep.subr.mxu0 0.0
    %125 = vmatpush1.msra.mxu0 0.0
    %126 = vmatprep.subr.mxu0 0.0
    %127 = vmatpush1.msra.mxu0 0.0
    %128 = vmatprep.subr.mxu0 0.0
    %129 = vmatpush1.msra.mxu0 0.0
    %130 = vmatprep.subr.mxu0 0.0
    %131 = vmatpush1.msra.mxu0 0.0
    %132 = vmatprep.subr.mxu0 0.0
    %133 = vmatpush1.msra.mxu0 0.0
    %134 = vmatprep.subr.mxu0 0.0
    %135 = vmatpush1.msra.mxu0 0.0
    %136 = vmatprep.subr.mxu0 0.0
    %137 = vmatpush1.msra.mxu0 0.0
    %138 = vmatprep.subr.mxu0 0.0
    %139 = vmatpush1.msra.mxu0 0.0
    %140 = vmatprep.subr.mxu0 0.0
    %141 = vmatpush1.msra.mxu0 0.0
    %142 = vmatprep.subr.mxu0 0.0
    %143 = vmatpush1.msra.mxu0 0.0
    %144 = vmatprep.subr.mxu0 0.0
    %145 = vmatpush1.msra.mxu0 0.0
    %146 = vmatprep.subr.mxu0 0.0
    %147 = vmatpush1.msra.mxu0 0.0
    %148 = vmatprep.subr.mxu0 0.0
    %149 = vmatpush1.msra.mxu0 0.0
    %150 = vmatprep.subr.mxu0 0.0
    %151 = vmatpush1.msra.mxu0 0.0
    %152 = vmatprep.subr.mxu0 0.0
    %153 = vmatpush1.msra.mxu0 0.0
    %154 = vmatprep.subr.mxu0 0.0
    %155 = vmatpush1.msra.mxu0 0.0
    %156 = vmatprep.subr.mxu0 0.0
    %157 = vmatpush1.msra.mxu0 0.0
    %158 = vmatprep.subr.mxu0 0.0
    %159 = vmatpush1.msra.mxu0 0.0
    %160 = vmatprep.subr.mxu0 0.0
    %161 = vmatpush1.msra.mxu0 0.0
    %162 = vmatprep.mubr.f32.mxu0 0.0
    %163 = vmatmul.mubr.f32.gmra.mrb[0].mxu0 %v96
    %v164 = vpop.f32.mrb[0].mxu0
    %v165 = vadd.f32 %v92, %v164
    %v166 = vpop.f32.mrb[0].mxu0
    %167 = vdwg.mxu0
    %169 = vrot.lane.b32.xlu0 %v165, 96
    %v170 = vpop.permute.xlu0 %169
    %vm171 = vcmask 64512
    %v172 = vsel %vm171, %v165, 0
    %v174 = vsel %vm171, %v170, 0
    %176 = vmatprep.subr.mxu0 0.0
    %177 = vmatpush1.xpose.msra.mxu0 %v174
    %178 = vmatprep.subr.mxu0 0.0
    %179 = vmatpush1.xpose.msra.mxu0 0.0
    %180 = vmatprep.subr.mxu0 0.0
    %181 = vmatpush1.xpose.msra.mxu0 0.0
    %182 = vmatprep.subr.mxu0 0.0
    %183 = vmatpush1.xpose.msra.mxu0 0.0
    %184 = vmatprep.subr.mxu0 0.0
    %185 = vmatpush1.xpose.msra.mxu0 0.0
    %186 = vmatprep.subr.mxu0 0.0
    %187 = vmatpush1.xpose.msra.mxu0 0.0
    %188 = vmatprep.subr.mxu0 0.0
    %189 = vmatpush1.xpose.msra.mxu0 0.0
    %190 = vmatprep.subr.mxu0 0.0
    %191 = vmatpush1.xpose.msra.mxu0 0.0
    %192 = vmatprep.subr.mxu0 0.0
    %193 = vmatpush1.xpose.msra.mxu0 0.0
    %194 = vmatprep.subr.mxu0 0.0
    %195 = vmatpush1.xpose.msra.mxu0 0.0
    %196 = vmatprep.subr.mxu0 0.0
    %197 = vmatpush1.xpose.msra.mxu0 0.0
    %198 = vmatprep.subr.mxu0 0.0
    %199 = vmatpush1.xpose.msra.mxu0 0.0
    %200 = vmatprep.subr.mxu0 0.0
    %201 = vmatpush1.xpose.msra.mxu0 0.0
    %202 = vmatprep.subr.mxu0 0.0
    %203 = vmatpush1.xpose.msra.mxu0 0.0
    %204 = vmatprep.subr.mxu0 0.0
    %205 = vmatpush1.xpose.msra.mxu0 0.0
    %206 = vmatprep.subr.mxu0 0.0
    %207 = vmatpush1.xpose.msra.mxu0 0.0
    %208 = vmatprep.subr.mxu0 0.0
    %209 = vmatpush1.xpose.msra.mxu0 0.0
    %210 = vmatprep.subr.mxu0 0.0
    %211 = vmatpush1.xpose.msra.mxu0 0.0
    %212 = vmatprep.subr.mxu0 0.0
    %213 = vmatpush1.xpose.msra.mxu0 0.0
    %214 = vmatprep.subr.mxu0 0.0
    %215 = vmatpush1.xpose.msra.mxu0 0.0
    %216 = vmatprep.subr.mxu0 0.0
    %217 = vmatpush1.xpose.msra.mxu0 0.0
    %218 = vmatprep.subr.mxu0 0.0
    %219 = vmatpush1.xpose.msra.mxu0 0.0
    %220 = vmatprep.subr.mxu0 0.0
    %221 = vmatpush1.xpose.msra.mxu0 0.0
    %222 = vmatprep.subr.mxu0 0.0
    %223 = vmatpush1.xpose.msra.mxu0 0.0
    %224 = vmatprep.subr.mxu0 0.0
    %225 = vmatpush1.xpose.msra.mxu0 0.0
    %226 = vmatprep.subr.mxu0 0.0
    %227 = vmatpush1.xpose.msra.mxu0 0.0
    %228 = vmatprep.subr.mxu0 0.0
    %229 = vmatpush1.xpose.msra.mxu0 0.0
    %230 = vmatprep.subr.mxu0 0.0
    %231 = vmatpush1.xpose.msra.mxu0 0.0
    %232 = vmatprep.subr.mxu0 0.0
    %233 = vmatpush1.xpose.msra.mxu0 0.0
    %234 = vmatprep.subr.mxu0 0.0
    %235 = vmatpush1.xpose.msra.mxu0 0.0
    %236 = vmatprep.subr.mxu0 0.0
    %237 = vmatpush1.xpose.msra.mxu0 0.0
    %238 = vmatprep.subr.mxu0 0.0
    %239 = vmatpush1.xpose.msra.mxu0 0.0
    %240 = vmatprep.mubr.f32.mxu0 0.0
    %241 = vmatmul.mubr.f32.gmra.mrb[0].mxu0 %v172
    %v242 = vpop.f32.mrb[0].mxu0
    %v243 = vadd.f32 0.0, %v242
    %v244 = vpop.f32.mrb[0].mxu0
    %245 = vdwg.mxu0
    %v246 = vmul.f32 %v243, 0.35355338
    %v247 = vsel %vm171, %v246, -inf
    %248 = vmax.xlane.f32.xlu0 %v247
    %v249 = vpop.xlane.xlu0 %248
    %v250 = vsub.f32 %v246, %v249
    %v251 = vmul.f32 %v250, 1.442695
    %v252 = vpow.pop %v251
    %v253 = vsel %vm171, %v252, 0.0
    %254 = vadd.xlane.f32.xlu0 %v253
    %v255 = vpop.xlane.xlu0 %254
    %v256 = vrcp.pop %v255
    %v257 = vmul.f32 %v252, %v256
    %258 = vrot.lane.b32.xlu0 %v165, 64
    %v259 = vpop.permute.xlu0 %258
    %v262 = vsel %vm171, %v257, 0
    %264 = vmatprep.subr.mxu0 0.0
    %265 = vmatpush1.msra.mxu0 %v259
    %266 = vmatprep.subr.mxu0 0.0
    %267 = vmatpush1.msra.mxu0 0.0
    %268 = vmatprep.subr.mxu0 0.0
    %269 = vmatpush1.msra.mxu0 0.0
    %270 = vmatprep.subr.mxu0 0.0
    %271 = vmatpush1.msra.mxu0 0.0
    %272 = vmatprep.subr.mxu0 0.0
    %273 = vmatpush1.msra.mxu0 0.0
    %274 = vmatprep.subr.mxu0 0.0
    %275 = vmatpush1.msra.mxu0 0.0
    %276 = vmatprep.subr.mxu0 0.0
    %277 = vmatpush1.msra.mxu0 0.0
    %278 = vmatprep.subr.mxu0 0.0
    %279 = vmatpush1.msra.mxu0 0.0
    %280 = vmatprep.subr.mxu0 0.0
    %281 = vmatpush1.msra.mxu0 0.0
    %282 = vmatprep.subr.mxu0 0.0
    %283 = vmatpush1.msra.mxu0 0.0
    %284 = vmatprep.subr.mxu0 0.0
    %285 = vmatpush1.msra.mxu0 0.0
    %286 = vmatprep.subr.mxu0 0.0
    %287 = vmatpush1.msra.mxu0 0.0
    %288 = vmatprep.subr.mxu0 0.0
    %289 = vmatpush1.msra.mxu0 0.0
    %290 = vmatprep.subr.mxu0 0.0
    %291 = vmatpush1.msra.mxu0 0.0
    %292 = vmatprep.subr.mxu0 0.0
    %293 = vmatpush1.msra.mxu0 0.0
    %294 = vmatprep.subr.mxu0 0.0
    %295 = vmatpush1.msra.mxu0 0.0
    %296 = vmatprep.subr.mxu0 0.0
    %297 = vmatpush1.msra.mxu0 0.0
    %298 = vmatprep.subr.mxu0 0.0
    %299 = vmatpush1.msra.mxu0 0.0
    %300 = vmatprep.subr.mxu0 0.0
    %301 = vmatpush1.msra.mxu0 0.0
    %302 = vmatprep.subr.mxu0 0.0
    %303 = vmatpush1.msra.mxu0 0.0
    %304 = vmatprep.subr.mxu0 0.0
    %305 = vmatpush1.msra.mxu0 0.0
    %306 = vmatprep.subr.mxu0 0.0
    %307 = vmatpush1.msra.mxu0 0.0
    %308 = vmatprep.subr.mxu0 0.0
    %309 = vmatpush1.msra.mxu0 0.0
    %310 = vmatprep.subr.mxu0 0.0
    %311 = vmatpush1.msra.mxu0 0.0
    %312 = vmatprep.subr.mxu0 0.0
    %313 = vmatpush1.msra.mxu0 0.0
    %314 = vmatprep.subr.mxu0 0.0
    %315 = vmatpush1.msra.mxu0 0.0
    %316 = vmatprep.subr.mxu0 0.0
    %317 = vmatpush1.msra.mxu0 0.0
    %318 = vmatprep.subr.mxu0 0.0
    %319 = vmatpush1.msra.mxu0 0.0
    %320 = vmatprep.subr.mxu0 0.0
    %321 = vmatpush1.msra.mxu0 0.0
    %322 = vmatprep.subr.mxu0 0.0
    %323 = vmatpush1.msra.mxu0 0.0
    %324 = vmatprep.subr.mxu0 0.0
    %325 = vmatpush1.msra.mxu0 0.0
    %326 = vmatprep.subr.mxu0 0.0
    %327 = vmatpush1.msra.mxu0 0.0
    %328 = vmatprep.mubr.f32.mxu0 0.0
    %329 = vmatmul.mubr.f32.gmra.mrb[0].mxu0 %v262
    %v330 = vpop.f32.mrb[0].mxu0
    %v331 = vadd.f32 0.0, %v330
    %v332 = vpop.f32.mrb[0].mxu0
    %333 = vdwg.mxu0
    %334 = vrot.lane.b32.xlu0 %v165, 120
    %v335 = vpop.permute.xlu0 %334
    %336 = vrot.lane.b32.xlu0 %v165, 88
    %v337 = vpop.permute.xlu0 %336
    %v338 = vsel %vm171, %v335, 0
    %v340 = vsel %vm171, %v337, 0
    %342 = vmatprep.subr.mxu0 0.0
    %343 = vmatpush1.xpose.msra.mxu0 %v340
    %344 = vmatprep.subr.mxu0 0.0
    %345 = vmatpush1.xpose.msra.mxu0 0.0
    %346 = vmatprep.subr.mxu0 0.0
    %347 = vmatpush1.xpose.msra.mxu0 0.0
    %348 = vmatprep.subr.mxu0 0.0
    %349 = vmatpush1.xpose.msra.mxu0 0.0
    %350 = vmatprep.subr.mxu0 0.0
    %351 = vmatpush1.xpose.msra.mxu0 0.0
    %352 = vmatprep.subr.mxu0 0.0
    %353 = vmatpush1.xpose.msra.mxu0 0.0
    %354 = vmatprep.subr.mxu0 0.0
    %355 = vmatpush1.xpose.msra.mxu0 0.0
    %356 = vmatprep.subr.mxu0 0.0
    %357 = vmatpush1.xpose.msra.mxu0 0.0
    %358 = vmatprep.subr.mxu0 0.0
    %359 = vmatpush1.xpose.msra.mxu0 0.0
    %360 = vmatprep.subr.mxu0 0.0
    %361 = vmatpush1.xpose.msra.mxu0 0.0
    %362 = vmatprep.subr.mxu0 0.0
    %363 = vmatpush1.xpose.msra.mxu0 0.0
    %364 = vmatprep.subr.mxu0 0.0
    %365 = vmatpush1.xpose.msra.mxu0 0.0
    %366 = vmatprep.subr.mxu0 0.0
    %367 = vmatpush1.xpose.msra.mxu0 0.0
    %368 = vmatprep.subr.mxu0 0.0
    %369 = vmatpush1.xpose.msra.mxu0 0.0
    %370 = vmatprep.subr.mxu0 0.0
    %371 = vmatpush1.xpose.msra.mxu0 0.0
    %372 = vmatprep.subr.mxu0 0.0
    %373 = vmatpush1.xpose.msra.mxu0 0.0
    %374 = vmatprep.subr.mxu0 0.0
    %375 = vmatpush1.xpose.msra.mxu0 0.0
    %376 = vmatprep.subr.mxu0 0.0
    %377 = vmatpush1.xpose.msra.mxu0 0.0
    %378 = vmatprep.subr.mxu0 0.0
    %379 = vmatpush1.xpose.msra.mxu0 0.0
    %380 = vmatprep.subr.mxu0 0.0
    %381 = vmatpush1.xpose.msra.mxu0 0.0
    %382 = vmatprep.subr.mxu0 0.0
    %383 = vmatpush1.xpose.msra.mxu0 0.0
    %384 = vmatprep.subr.mxu0 0.0
    %385 = vmatpush1.xpose.msra.mxu0 0.0
    %386 = vmatprep.subr.mxu0 0.0
    %387 = vmatpush1.xpose.msra.mxu0 0.0
    %388 = vmatprep.subr.mxu0 0.0
    %389 = vmatpush1.xpose.msra.mxu0 0.0
    %390 = vmatprep.subr.mxu0 0.0
    %391 = vmatpush1.xpose.msra.mxu0 0.0
    %392 = vmatprep.subr.mxu0 0.0
    %393 = vmatpush1.xpose.msra.mxu0 0.0
    %394 = vmatprep.subr.mxu0 0.0
    %395 = vmatpush1.xpose.msra.mxu0 0.0
    %396 = vmatprep.subr.mxu0 0.0
    %397 = vmatpush1.xpose.msra.mxu0 0.0
    %398 = vmatprep.subr.mxu0 0.0
    %399 = vmatpush1.xpose.msra.mxu0 0.0
    %400 = vmatprep.subr.mxu0 0.0
    %401 = vmatpush1.xpose.msra.mxu0 0.0
    %402 = vmatprep.subr.mxu0 0.0
    %403 = vmatpush1.xpose.msra.mxu0 0.0
    %404 = vmatprep.subr.mxu0 0.0
    %405 = vmatpush1.xpose.msra.mxu0 0.0
    %406 = vmatprep.mubr.f32.mxu0 0.0
    %407 = vmatmul.mubr.f32.gmra.mrb[0].mxu0 %v338
    %v408 = vpop.f32.mrb[0].mxu0
    %v409 = vadd.f32 0.0, %v408
    %v410 = vpop.f32.mrb[0].mxu0
    %411 = vdwg.mxu0
    %v412 = vmul.f32 %v409, 0.35355338
    %v413 = vsel %vm171, %v412, -inf
    %414 = vmax.xlane.f32.xlu0 %v413
    %v415 = vpop.xlane.xlu0 %414
    %v416 = vsub.f32 %v412, %v415
    %v417 = vmul.f32 %v416, 1.442695
    %v418 = vpow.pop %v417
    %v419 = vsel %vm171, %v418, 0.0
    %420 = vadd.xlane.f32.xlu0 %v419
    %v421 = vpop.xlane.xlu0 %420
    %v422 = vrcp.pop %v421
    %v423 = vmul.f32 %v418, %v422
    %424 = vrot.lane.b32.xlu0 %v165, 56
    %v425 = vpop.permute.xlu0 %424
    %v428 = vsel %vm171, %v423, 0
    %430 = vmatprep.subr.mxu0 0.0
    %431 = vmatpush1.msra.mxu0 %v425
    %432 = vmatprep.subr.mxu0 0.0
    %433 = vmatpush1.msra.mxu0 0.0
    %434 = vmatprep.subr.mxu0 0.0
    %435 = vmatpush1.msra.mxu0 0.0
    %436 = vmatprep.subr.mxu0 0.0
    %437 = vmatpush1.msra.mxu0 0.0
    %438 = vmatprep.subr.mxu0 0.0
    %439 = vmatpush1.msra.mxu0 0.0
    %440 = vmatprep.subr.mxu0 0.0
    %441 = vmatpush1.msra.mxu0 0.0
    %442 = vmatprep.subr.mxu0 0.0
    %443 = vmatpush1.msra.mxu0 0.0
    %444 = vmatprep.subr.mxu0 0.0
    %445 = vmatpush1.msra.mxu0 0.0
    %446 = vmatprep.subr.mxu0 0.0
    %447 = vmatpush1.msra.mxu0 0.0
    %448 = vmatprep.subr.mxu0 0.0
    %449 = vmatpush1.msra.mxu0 0.0
    %450 = vmatprep.subr.mxu0 0.0
    %451 = vmatpush1.msra.mxu0 0.0
    %452 = vmatprep.subr.mxu0 0.0
    %453 = vmatpush1.msra.mxu0 0.0
    %454 = vmatprep.subr.mxu0 0.0
    %455 = vmatpush1.msra.mxu0 0.0
    %456 = vmatprep.subr.mxu0 0.0
    %457 = vmatpush1.msra.mxu0 0.0
    %458 = vmatprep.subr.mxu0 0.0
    %459 = vmatpush1.msra.mxu0 0.0
    %460 = vmatprep.subr.mxu0 0.0
    %461 = vmatpush1.msra.mxu0 0.0
    %462 = vmatprep.subr.mxu0 0.0
    %463 = vmatpush1.msra.mxu0 0.0
    %464 = vmatprep.subr.mxu0 0.0
    %465 = vmatpush1.msra.mxu0 0.0
    %466 = vmatprep.subr.mxu0 0.0
    %467 = vmatpush1.msra.mxu0 0.0
    %468 = vmatprep.subr.mxu0 0.0
    %469 = vmatpush1.msra.mxu0 0.0
    %470 = vmatprep.subr.mxu0 0.0
    %471 = vmatpush1.msra.mxu0 0.0
    %472 = vmatprep.subr.mxu0 0.0
    %473 = vmatpush1.msra.mxu0 0.0
    %474 = vmatprep.subr.mxu0 0.0
    %475 = vmatpush1.msra.mxu0 0.0
    %476 = vmatprep.subr.mxu0 0.0
    %477 = vmatpush1.msra.mxu0 0.0
    %478 = vmatprep.subr.mxu0 0.0
    %479 = vmatpush1.msra.mxu0 0.0
    %480 = vmatprep.subr.mxu0 0.0
    %481 = vmatpush1.msra.mxu0 0.0
    %482 = vmatprep.subr.mxu0 0.0
    %483 = vmatpush1.msra.mxu0 0.0
    %484 = vmatprep.subr.mxu0 0.0
    %485 = vmatpush1.msra.mxu0 0.0
    %486 = vmatprep.subr.mxu0 0.0
    %487 = vmatpush1.msra.mxu0 0.0
    %488 = vmatprep.subr.mxu0 0.0
    %489 = vmatpush1.msra.mxu0 0.0
    %490 = vmatprep.subr.mxu0 0.0
    %491 = vmatpush1.msra.mxu0 0.0
    %492 = vmatprep.subr.mxu0 0.0
    %493 = vmatpush1.msra.mxu0 0.0
    %494 = vmatprep.mubr.f32.mxu0 0.0
    %495 = vmatmul.mubr.f32.gmra.mrb[0].mxu0 %v428
    %v496 = vpop.f32.mrb[0].mxu0
    %v497 = vadd.f32 0.0, %v496
    %v498 = vpop.f32.mrb[0].mxu0
    %499 = vdwg.mxu0
    %500 = vrot.lane.b32.xlu0 %v165, 112
    %v501 = vpop.permute.xlu0 %500
    %502 = vrot.lane.b32.xlu0 %v165, 80
    %v503 = vpop.permute.xlu0 %502
    %v504 = vsel %vm171, %v501, 0
    %v506 = vsel %vm171, %v503, 0
    %508 = vmatprep.subr.mxu0 0.0
    %509 = vmatpush1.xpose.msra.mxu0 %v506
    %510 = vmatprep.subr.mxu0 0.0
    %511 = vmatpush1.xpose.msra.mxu0 0.0
    %512 = vmatprep.subr.mxu0 0.0
    %513 = vmatpush1.xpose.msra.mxu0 0.0
    %514 = vmatprep.subr.mxu0 0.0
    %515 = vmatpush1.xpose.msra.mxu0 0.0
    %516 = vmatprep.subr.mxu0 0.0
    %517 = vmatpush1.xpose.msra.mxu0 0.0
    %518 = vmatprep.subr.mxu0 0.0
    %519 = vmatpush1.xpose.msra.mxu0 0.0
    %520 = vmatprep.subr.mxu0 0.0
    %521 = vmatpush1.xpose.msra.mxu0 0.0
    %522 = vmatprep.subr.mxu0 0.0
    %523 = vmatpush1.xpose.msra.mxu0 0.0
    %524 = vmatprep.subr.mxu0 0.0
    %525 = vmatpush1.xpose.msra.mxu0 0.0
    %526 = vmatprep.subr.mxu0 0.0
    %527 = vmatpush1.xpose.msra.mxu0 0.0
    %528 = vmatprep.subr.mxu0 0.0
    %529 = vmatpush1.xpose.msra.mxu0 0.0
    %530 = vmatprep.subr.mxu0 0.0
    %531 = vmatpush1.xpose.msra.mxu0 0.0
    %532 = vmatprep.subr.mxu0 0.0
    %533 = vmatpush1.xpose.msra.mxu0 0.0
    %534 = vmatprep.subr.mxu0 0.0
    %535 = vmatpush1.xpose.msra.mxu0 0.0
    %536 = vmatprep.subr.mxu0 0.0
    %537 = vmatpush1.xpose.msra.mxu0 0.0
    %538 = vmatprep.subr.mxu0 0.0
    %539 = vmatpush1.xpose.msra.mxu0 0.0
    %540 = vmatprep.subr.mxu0 0.0
    %541 = vmatpush1.xpose.msra.mxu0 0.0
    %542 = vmatprep.subr.mxu0 0.0
    %543 = vmatpush1.xpose.msra.mxu0 0.0
    %544 = vmatprep.subr.mxu0 0.0
    %545 = vmatpush1.xpose.msra.mxu0 0.0
    %546 = vmatprep.subr.mxu0 0.0
    %547 = vmatpush1.xpose.msra.mxu0 0.0
    %548 = vmatprep.subr.mxu0 0.0
    %549 = vmatpush1.xpose.msra.mxu0 0.0
    %550 = vmatprep.subr.mxu0 0.0
    %551 = vmatpush1.xpose.msra.mxu0 0.0
    %552 = vmatprep.subr.mxu0 0.0
    %553 = vmatpush1.xpose.msra.mxu0 0.0
    %554 = vmatprep.subr.mxu0 0.0
    %555 = vmatpush1.xpose.msra.mxu0 0.0
    %556 = vmatprep.subr.mxu0 0.0
    %557 = vmatpush1.xpose.msra.mxu0 0.0
    %558 = vmatprep.subr.mxu0 0.0
    %559 = vmatpush1.xpose.msra.mxu0 0.0
    %560 = vmatprep.subr.mxu0 0.0
    %561 = vmatpush1.xpose.msra.mxu0 0.0
    %562 = vmatprep.subr.mxu0 0.0
    %563 = vmatpush1.xpose.msra.mxu0 0.0
    %564 = vmatprep.subr.mxu0 0.0
    %565 = vmatpush1.xpose.msra.mxu0 0.0
    %566 = vmatprep.subr.mxu0 0.0
    %567 = vmatpush1.xpose.msra.mxu0 0.0
    %568 = vmatprep.subr.mxu0 0.0
    %569 = vmatpush1.xpose.msra.mxu0 0.0
    %570 = vmatprep.subr.mxu0 0.0
    %571 = vmatpush1.xpose.msra.mxu0 0.0
    %572 = vmatprep.mubr.f32.mxu0 0.0
    %573 = vmatmul.mubr.f32.gmra.mrb[0].mxu0 %v504
    %v574 = vpop.f32.mrb[0].mxu0
    %v575 = vadd.f32 0.0, %v574
    %v576 = vpop.f32.mrb[0].mxu0
    %577 = vdwg.mxu0
    %v578 = vmul.f32 %v575, 0.35355338
    %v579 = vsel %vm171, %v578, -inf
    %580 = vmax.xlane.f32.xlu0 %v579
    %v581 = vpop.xlane.xlu0 %580
    %v582 = vsub.f32 %v578, %v581
    %v583 = vmul.f32 %v582, 1.442695
    %v584 = vpow.pop %v583
    %v585 = vsel %vm171, %v584, 0.0
    %586 = vadd.xlane.f32.xlu0 %v585
    %v587 = vpop.xlane.xlu0 %586
    %v588 = vrcp.pop %v587
    %v589 = vmul.f32 %v584, %v588
    %590 = vrot.lane.b32.xlu0 %v165, 48
    %v591 = vpop.permute.xlu0 %590
    %v594 = vsel %vm171, %v589, 0
    %596 = vmatprep.subr.mxu0 0.0
    %597 = vmatpush1.msra.mxu0 %v591
    %598 = vmatprep.subr.mxu0 0.0
    %599 = vmatpush1.msra.mxu0 0.0
    %600 = vmatprep.subr.mxu0 0.0
    %601 = vmatpush1.msra.mxu0 0.0
    %602 = vmatprep.subr.mxu0 0.0
    %603 = vmatpush1.msra.mxu0 0.0
    %604 = vmatprep.subr.mxu0 0.0
    %605 = vmatpush1.msra.mxu0 0.0
    %606 = vmatprep.subr.mxu0 0.0
    %607 = vmatpush1.msra.mxu0 0.0
    %608 = vmatprep.subr.mxu0 0.0
    %609 = vmatpush1.msra.mxu0 0.0
    %610 = vmatprep.subr.mxu0 0.0
    %611 = vmatpush1.msra.mxu0 0.0
    %612 = vmatprep.subr.mxu0 0.0
    %613 = vmatpush1.msra.mxu0 0.0
    %614 = vmatprep.subr.mxu0 0.0
    %615 = vmatpush1.msra.mxu0 0.0
    %616 = vmatprep.subr.mxu0 0.0
    %617 = vmatpush1.msra.mxu0 0.0
    %618 = vmatprep.subr.mxu0 0.0
    %619 = vmatpush1.msra.mxu0 0.0
    %620 = vmatprep.subr.mxu0 0.0
    %621 = vmatpush1.msra.mxu0 0.0
    %622 = vmatprep.subr.mxu0 0.0
    %623 = vmatpush1.msra.mxu0 0.0
    %624 = vmatprep.subr.mxu0 0.0
    %625 = vmatpush1.msra.mxu0 0.0
    %626 = vmatprep.subr.mxu0 0.0
    %627 = vmatpush1.msra.mxu0 0.0
    %628 = vmatprep.subr.mxu0 0.0
    %629 = vmatpush1.msra.mxu0 0.0
    %630 = vmatprep.subr.mxu0 0.0
    %631 = vmatpush1.msra.mxu0 0.0
    %632 = vmatprep.subr.mxu0 0.0
    %633 = vmatpush1.msra.mxu0 0.0
    %634 = vmatprep.subr.mxu0 0.0
    %635 = vmatpush1.msra.mxu0 0.0
    %636 = vmatprep.subr.mxu0 0.0
    %637 = vmatpush1.msra.mxu0 0.0
    %638 = vmatprep.subr.mxu0 0.0
    %639 = vmatpush1.msra.mxu0 0.0
    %640 = vmatprep.subr.mxu0 0.0
    %641 = vmatpush1.msra.mxu0 0.0
    %642 = vmatprep.subr.mxu0 0.0
    %643 = vmatpush1.msra.mxu0 0.0
    %644 = vmatprep.subr.mxu0 0.0
    %645 = vmatpush1.msra.mxu0 0.0
    %646 = vmatprep.subr.mxu0 0.0
    %647 = vmatpush1.msra.mxu0 0.0
    %648 = vmatprep.subr.mxu0 0.0
    %649 = vmatpush1.msra.mxu0 0.0
    %650 = vmatprep.subr.mxu0 0.0
    %651 = vmatpush1.msra.mxu0 0.0
    %652 = vmatprep.subr.mxu0 0.0
    %653 = vmatpush1.msra.mxu0 0.0
    %654 = vmatprep.subr.mxu0 0.0
    %655 = vmatpush1.msra.mxu0 0.0
    %656 = vmatprep.subr.mxu0 0.0
    %657 = vmatpush1.msra.mxu0 0.0
    %658 = vmatprep.subr.mxu0 0.0
    %659 = vmatpush1.msra.mxu0 0.0
    %660 = vmatprep.mubr.f32.mxu0 0.0
    %661 = vmatmul.mubr.f32.gmra.mrb[0].mxu0 %v594
    %v662 = vpop.f32.mrb[0].mxu0
    %v663 = vadd.f32 0.0, %v662
    %v664 = vpop.f32.mrb[0].mxu0
    %665 = vdwg.mxu0
    %666 = vrot.lane.b32.xlu0 %v165, 104
    %v667 = vpop.permute.xlu0 %666
    %668 = vrot.lane.b32.xlu0 %v165, 72
    %v669 = vpop.permute.xlu0 %668
    %v670 = vsel %vm171, %v667, 0
    %v672 = vsel %vm171, %v669, 0
    %674 = vmatprep.subr.mxu0 0.0
    %675 = vmatpush1.xpose.msra.mxu0 %v672
    %676 = vmatprep.subr.mxu0 0.0
    %677 = vmatpush1.xpose.msra.mxu0 0.0
    %678 = vmatprep.subr.mxu0 0.0
    %679 = vmatpush1.xpose.msra.mxu0 0.0
    %680 = vmatprep.subr.mxu0 0.0
    %681 = vmatpush1.xpose.msra.mxu0 0.0
    %682 = vmatprep.subr.mxu0 0.0
    %683 = vmatpush1.xpose.msra.mxu0 0.0
    %684 = vmatprep.subr.mxu0 0.0
    %685 = vmatpush1.xpose.msra.mxu0 0.0
    %686 = vmatprep.subr.mxu0 0.0
    %687 = vmatpush1.xpose.msra.mxu0 0.0
    %688 = vmatprep.subr.mxu0 0.0
    %689 = vmatpush1.xpose.msra.mxu0 0.0
    %690 = vmatprep.subr.mxu0 0.0
    %691 = vmatpush1.xpose.msra.mxu0 0.0
    %692 = vmatprep.subr.mxu0 0.0
    %693 = vmatpush1.xpose.msra.mxu0 0.0
    %694 = vmatprep.subr.mxu0 0.0
    %695 = vmatpush1.xpose.msra.mxu0 0.0
    %696 = vmatprep.subr.mxu0 0.0
    %697 = vmatpush1.xpose.msra.mxu0 0.0
    %698 = vmatprep.subr.mxu0 0.0
    %699 = vmatpush1.xpose.msra.mxu0 0.0
    %700 = vmatprep.subr.mxu0 0.0
    %701 = vmatpush1.xpose.msra.mxu0 0.0
    %702 = vmatprep.subr.mxu0 0.0
    %703 = vmatpush1.xpose.msra.mxu0 0.0
    %704 = vmatprep.subr.mxu0 0.0
    %705 = vmatpush1.xpose.msra.mxu0 0.0
    %706 = vmatprep.subr.mxu0 0.0
    %707 = vmatpush1.xpose.msra.mxu0 0.0
    %708 = vmatprep.subr.mxu0 0.0
    %709 = vmatpush1.xpose.msra.mxu0 0.0
    %710 = vmatprep.subr.mxu0 0.0
    %711 = vmatpush1.xpose.msra.mxu0 0.0
    %712 = vmatprep.subr.mxu0 0.0
    %713 = vmatpush1.xpose.msra.mxu0 0.0
    %714 = vmatprep.subr.mxu0 0.0
    %715 = vmatpush1.xpose.msra.mxu0 0.0
    %716 = vmatprep.subr.mxu0 0.0
    %717 = vmatpush1.xpose.msra.mxu0 0.0
    %718 = vmatprep.subr.mxu0 0.0
    %719 = vmatpush1.xpose.msra.mxu0 0.0
    %720 = vmatprep.subr.mxu0 0.0
    %721 = vmatpush1.xpose.msra.mxu0 0.0
    %722 = vmatprep.subr.mxu0 0.0
    %723 = vmatpush1.xpose.msra.mxu0 0.0
    %724 = vmatprep.subr.mxu0 0.0
    %725 = vmatpush1.xpose.msra.mxu0 0.0
    %726 = vmatprep.subr.mxu0 0.0
    %727 = vmatpush1.xpose.msra.mxu0 0.0
    %728 = vmatprep.subr.mxu0 0.0
    %729 = vmatpush1.xpose.msra.mxu0 0.0
    %730 = vmatprep.subr.mxu0 0.0
    %731 = vmatpush1.xpose.msra.mxu0 0.0
    %732 = vmatprep.subr.mxu0 0.0
    %733 = vmatpush1.xpose.msra.mxu0 0.0
    %734 = vmatprep.subr.mxu0 0.0
    %735 = vmatpush1.xpose.msra.mxu0 0.0
    %736 = vmatprep.subr.mxu0 0.0
    %737 = vmatpush1.xpose.msra.mxu0 0.0
    %738 = vmatprep.mubr.f32.mxu0 0.0
    %739 = vmatmul.mubr.f32.gmra.mrb[0].mxu0 %v670
    %v740 = vpop.f32.mrb[0].mxu0
    %v741 = vadd.f32 0.0, %v740
    %v742 = vpop.f32.mrb[0].mxu0
    %743 = vdwg.mxu0
    %v744 = vmul.f32 %v741, 0.35355338
    %v745 = vsel %vm171, %v744, -inf
    %746 = vmax.xlane.f32.xlu0 %v745
    %v747 = vpop.xlane.xlu0 %746
    %v748 = vsub.f32 %v744, %v747
    %v749 = vmul.f32 %v748, 1.442695
    %v750 = vpow.pop %v749
    %v751 = vsel %vm171, %v750, 0.0
    %752 = vadd.xlane.f32.xlu0 %v751
    %v753 = vpop.xlane.xlu0 %752
    %v754 = vrcp.pop %v753
    %v755 = vmul.f32 %v750, %v754
    %756 = vrot.lane.b32.xlu0 %v165, 40
    %v757 = vpop.permute.xlu0 %756
    %v760 = vsel %vm171, %v755, 0
    %762 = vmatprep.subr.mxu0 0.0
    %763 = vmatpush1.msra.mxu0 %v757
    %764 = vmatprep.subr.mxu0 0.0
    %765 = vmatpush1.msra.mxu0 0.0
    %766 = vmatprep.subr.mxu0 0.0
    %767 = vmatpush1.msra.mxu0 0.0
    %768 = vmatprep.subr.mxu0 0.0
    %769 = vmatpush1.msra.mxu0 0.0
    %770 = vmatprep.subr.mxu0 0.0
    %771 = vmatpush1.msra.mxu0 0.0
    %772 = vmatprep.subr.mxu0 0.0
    %773 = vmatpush1.msra.mxu0 0.0
    %774 = vmatprep.subr.mxu0 0.0
    %775 = vmatpush1.msra.mxu0 0.0
    %776 = vmatprep.subr.mxu0 0.0
    %777 = vmatpush1.msra.mxu0 0.0
    %778 = vmatprep.subr.mxu0 0.0
    %779 = vmatpush1.msra.mxu0 0.0
    %780 = vmatprep.subr.mxu0 0.0
    %781 = vmatpush1.msra.mxu0 0.0
    %782 = vmatprep.subr.mxu0 0.0
    %783 = vmatpush1.msra.mxu0 0.0
    %784 = vmatprep.subr.mxu0 0.0
    %785 = vmatpush1.msra.mxu0 0.0
    %786 = vmatprep.subr.mxu0 0.0
    %787 = vmatpush1.msra.mxu0 0.0
    %788 = vmatprep.subr.mxu0 0.0
    %789 = vmatpush1.msra.mxu0 0.0
    %790 = vmatprep.subr.mxu0 0.0
    %791 = vmatpush1.msra.mxu0 0.0
    %792 = vmatprep.subr.mxu0 0.0
    %793 = vmatpush1.msra.mxu0 0.0
    %794 = vmatprep.subr.mxu0 0.0
    %795 = vmatpush1.msra.mxu0 0.0
    %796 = vmatprep.subr.mxu0 0.0
    %797 = vmatpush1.msra.mxu0 0.0
    %798 = vmatprep.subr.mxu0 0.0
    %799 = vmatpush1.msra.mxu0 0.0
    %800 = vmatprep.subr.mxu0 0.0
    %801 = vmatpush1.msra.mxu0 0.0
    %802 = vmatprep.subr.mxu0 0.0
    %803 = vmatpush1.msra.mxu0 0.0
    %804 = vmatprep.subr.mxu0 0.0
    %805 = vmatpush1.msra.mxu0 0.0
    %806 = vmatprep.subr.mxu0 0.0
    %807 = vmatpush1.msra.mxu0 0.0
    %808 = vmatprep.subr.mxu0 0.0
    %809 = vmatpush1.msra.mxu0 0.0
    %810 = vmatprep.subr.mxu0 0.0
    %811 = vmatpush1.msra.mxu0 0.0
    %812 = vmatprep.subr.mxu0 0.0
    %813 = vmatpush1.msra.mxu0 0.0
    %814 = vmatprep.subr.mxu0 0.0
    %815 = vmatpush1.msra.mxu0 0.0
    %816 = vmatprep.subr.mxu0 0.0
    %817 = vmatpush1.msra.mxu0 0.0
    %818 = vmatprep.subr.mxu0 0.0
    %819 = vmatpush1.msra.mxu0 0.0
    %820 = vmatprep.subr.mxu0 0.0
    %821 = vmatpush1.msra.mxu0 0.0
    %822 = vmatprep.subr.mxu0 0.0
    %823 = vmatpush1.msra.mxu0 0.0
    %824 = vmatprep.subr.mxu0 0.0
    %825 = vmatpush1.msra.mxu0 0.0
    %826 = vmatprep.mubr.f32.mxu0 0.0
    %827 = vmatmul.mubr.f32.gmra.mrb[0].mxu0 %v760
    %v828 = vpop.f32.mrb[0].mxu0
    %v829 = vadd.f32 0.0, %v828
    %v830 = vpop.f32.mrb[0].mxu0
    %831 = vdwg.mxu0
    %833 = vrot.lane.b32.xlu0 %v497, 8
    %v834 = vpop.permute.xlu0 %833
    %837 = vrot.lane.b32.xlu0 %v663, 16
    %v838 = vpop.permute.xlu0 %837
    %841 = vrot.lane.b32.xlu0 %v829, 24
    %v842 = vpop.permute.xlu0 %841
    %v844 = vsel %vm171, %v331, %v834
    %vm845 = vcmask 130048
    %v846 = vsel %vm845, %v844, %v838
    %vm847 = vcmask 195584
    %v848 = vsel %vm847, %v846, %v842
    %v850 = vlaneseq
    %v851 = vshrl.u32 %v850, 7
    %v852 = vsub.s32 0, %v851
    %v853 = vrot.slane %v68, %v852
    %v856 = vsel %vm94, %v848, 0
    %858 = vmatprep.subr.mxu0 0.0
    %859 = vmatpush1.msra.mxu0 %v64
    %860 = vmatprep.subr.mxu0 0.0
    %861 = vmatpush1.msra.mxu0 %v65
    %862 = vmatprep.subr.mxu0 0.0
    %863 = vmatpush1.msra.mxu0 %v66
    %864 = vmatprep.subr.mxu0 0.0
    %865 = vmatpush1.msra.mxu0 %v67
    %866 = vmatprep.subr.mxu0 0.0
    %867 = vmatpush1.msra.mxu0 0.0
    %868 = vmatprep.subr.mxu0 0.0
    %869 = vmatpush1.msra.mxu0 0.0
    %870 = vmatprep.subr.mxu0 0.0
    %871 = vmatpush1.msra.mxu0 0.0
    %872 = vmatprep.subr.mxu0 0.0
    %873 = vmatpush1.msra.mxu0 0.0
    %874 = vmatprep.subr.mxu0 0.0
    %875 = vmatpush1.msra.mxu0 0.0
    %876 = vmatprep.subr.mxu0 0.0
    %877 = vmatpush1.msra.mxu0 0.0
    %878 = vmatprep.subr.mxu0 0.0
    %879 = vmatpush1.msra.mxu0 0.0
    %880 = vmatprep.subr.mxu0 0.0
    %881 = vmatpush1.msra.mxu0 0.0
    %882 = vmatprep.subr.mxu0 0.0
    %883 = vmatpush1.msra.mxu0 0.0
    %884 = vmatprep.subr.mxu0 0.0
    %885 = vmatpush1.msra.mxu0 0.0
    %886 = vmatprep.subr.mxu0 0.0
    %887 = vmatpush1.msra.mxu0 0.0
    %888 = vmatprep.subr.mxu0 0.0
    %889 = vmatpush1.msra.mxu0 0.0
    %890 = vmatprep.subr.mxu0 0.0
    %891 = vmatpush1.msra.mxu0 0.0
    %892 = vmatprep.subr.mxu0 0.0
    %893 = vmatpush1.msra.mxu0 0.0
    %894 = vmatprep.subr.mxu0 0.0
    %895 = vmatpush1.msra.mxu0 0.0
    %896 = vmatprep.subr.mxu0 0.0
    %897 = vmatpush1.msra.mxu0 0.0
    %898 = vmatprep.subr.mxu0 0.0
    %899 = vmatpush1.msra.mxu0 0.0
    %900 = vmatprep.subr.mxu0 0.0
    %901 = vmatpush1.msra.mxu0 0.0
    %902 = vmatprep.subr.mxu0 0.0
    %903 = vmatpush1.msra.mxu0 0.0
    %904 = vmatprep.subr.mxu0 0.0
    %905 = vmatpush1.msra.mxu0 0.0
    %906 = vmatprep.subr.mxu0 0.0
    %907 = vmatpush1.msra.mxu0 0.0
    %908 = vmatprep.subr.mxu0 0.0
    %909 = vmatpush1.msra.mxu0 0.0
    %910 = vmatprep.subr.mxu0 0.0
    %911 = vmatpush1.msra.mxu0 0.0
    %912 = vmatprep.subr.mxu0 0.0
    %913 = vmatpush1.msra.mxu0 0.0
    %914 = vmatprep.subr.mxu0 0.0
    %915 = vmatpush1.msra.mxu0 0.0
    %916 = vmatprep.subr.mxu0 0.0
    %917 = vmatpush1.msra.mxu0 0.0
    %918 = vmatprep.subr.mxu0 0.0
    %919 = vmatpush1.msra.mxu0 0.0
    %920 = vmatprep.subr.mxu0 0.0
    %921 = vmatpush1.msra.mxu0 0.0
    %922 = vmatprep.mubr.f32.mxu0 0.0
    %923 = vmatmul.mubr.f32.gmra.mrb[0].mxu0 %v856
    %v924 = vpop.f32.mrb[0].mxu0
    %v925 = vadd.f32 %v853, %v924
    %v926 = vpop.f32.mrb[0].mxu0
    %927 = vdwg.mxu0
    %v928 = vadd.f32 %v87, %v925
    %v929 = vsel %vm94, %v928, 0.0
    %930 = vadd.xlane.f32.xlu0 %v929
    %v931 = vpop.xlane.xlu0 %930
    %v932 = vrcp.pop 32.0
    %v933 = vmul.f32 %v931, %v932
    %v934 = vsub.f32 %v928, %v933
    %v935 = vmul.f32 %v934, %v934
    %v936 = vsel %vm94, %v935, 0.0
    %937 = vadd.xlane.f32.xlu0 %v936
    %v938 = vpop.xlane.xlu0 %937
    %v939 = vmul.f32 %v938, %v932
    %v940 = vadd.f32 %v939, 1e-05
    %v941 = vrsqrt.pop %v940
    %v942 = vmul.f32 %v934, %v941
    %v944 = vlaneseq
    %v945 = vshrl.u32 %v944, 7
    %v946 = vsub.s32 0, %v945
    %v947 = vrot.slane %v83, %v946
    %v949 = vmul.f32 %v942, %v947
    %v951 = vlaneseq
    %v952 = vshrl.u32 %v951, 7
    %v953 = vsub.s32 0, %v952
    %v954 = vrot.slane %v84, %v953
    %v956 = vadd.f32 %v949, %v954
    %v958 = vlaneseq
    %v959 = vshrl.u32 %v958, 7
    %v960 = vsub.s32 0, %v959
    %v961 = vrot.slane %v73, %v960
    %v964 = vsel %vm94, %v956, 0
    %966 = vmatprep.subr.mxu0 0.0
    %967 = vmatpush1.msra.mxu0 %v69
    %968 = vmatprep.subr.mxu0 0.0
    %969 = vmatpush1.msra.mxu0 %v70
    %970 = vmatprep.subr.mxu0 0.0
    %971 = vmatpush1.msra.mxu0 %v71
    %972 = vmatprep.subr.mxu0 0.0
    %973 = vmatpush1.msra.mxu0 %v72
    %974 = vmatprep.subr.mxu0 0.0
    %975 = vmatpush1.msra.mxu0 0.0
    %976 = vmatprep.subr.mxu0 0.0
    %977 = vmatpush1.msra.mxu0 0.0
    %978 = vmatprep.subr.mxu0 0.0
    %979 = vmatpush1.msra.mxu0 0.0
    %980 = vmatprep.subr.mxu0 0.0
    %981 = vmatpush1.msra.mxu0 0.0
    %982 = vmatprep.subr.mxu0 0.0
    %983 = vmatpush1.msra.mxu0 0.0
    %984 = vmatprep.subr.mxu0 0.0
    %985 = vmatpush1.msra.mxu0 0.0
    %986 = vmatprep.subr.mxu0 0.0
    %987 = vmatpush1.msra.mxu0 0.0
    %988 = vmatprep.subr.mxu0 0.0
    %989 = vmatpush1.msra.mxu0 0.0
    %990 = vmatprep.subr.mxu0 0.0
    %991 = vmatpush1.msra.mxu0 0.0
    %992 = vmatprep.subr.mxu0 0.0
    %993 = vmatpush1.msra.mxu0 0.0
    %994 = vmatprep.subr.mxu0 0.0
    %995 = vmatpush1.msra.mxu0 0.0
    %996 = vmatprep.subr.mxu0 0.0
    %997 = vmatpush1.msra.mxu0 0.0
    %998 = vmatprep.subr.mxu0 0.0
    %999 = vmatpush1.msra.mxu0 0.0
    %1000 = vmatprep.subr.mxu0 0.0
    %1001 = vmatpush1.msra.mxu0 0.0
    %1002 = vmatprep.subr.mxu0 0.0
    %1003 = vmatpush1.msra.mxu0 0.0
    %1004 = vmatprep.subr.mxu0 0.0
    %1005 = vmatpush1.msra.mxu0 0.0
    %1006 = vmatprep.subr.mxu0 0.0
    %1007 = vmatpush1.msra.mxu0 0.0
    %1008 = vmatprep.subr.mxu0 0.0
    %1009 = vmatpush1.msra.mxu0 0.0
    %1010 = vmatprep.subr.mxu0 0.0
    %1011 = vmatpush1.msra.mxu0 0.0
    %1012 = vmatprep.subr.mxu0 0.0
    %1013 = vmatpush1.msra.mxu0 0.0
    %1014 = vmatprep.subr.mxu0 0.0
    %1015 = vmatpush1.msra.mxu0 0.0
    %1016 = vmatprep.subr.mxu0 0.0
    %1017 = vmatpush1.msra.mxu0 0.0
    %1018 = vmatprep.subr.mxu0 0.0
    %1019 = vmatpush1.msra.mxu0 0.0
    %1020 = vmatprep.subr.mxu0 0.0
    %1021 = vmatpush1.msra.mxu0 0.0
    %1022 = vmatprep.subr.mxu0 0.0
    %1023 = vmatpush1.msra.mxu0 0.0
    %1024 = vmatprep.subr.mxu0 0.0
    %1025 = vmatpush1.msra.mxu0 0.0
    %1026 = vmatprep.subr.mxu0 0.0
    %1027 = vmatpush1.msra.mxu0 0.0
    %1028 = vmatprep.subr.mxu0 0.0
    %1029 = vmatpush1.msra.mxu0 0.0
    %1030 = vmatprep.mubr.f32.mxu0 0.0
    %1031 = vmatmul.mubr.f32.gmra.mrb[0].mxu0 %v964
    %v1032 = vpop.f32.mrb[0].mxu0
    %v1033 = vadd.f32 %v961, %v1032
    %v1034 = vpop.f32.mrb[0].mxu0
    %1035 = vdwg.mxu0
    %v1036 = vmax.f32 %v1033, 0.0
    %v1038 = vlaneseq
    %v1039 = vshrl.u32 %v1038, 7
    %v1040 = vsub.s32 0, %v1039
    %v1041 = vrot.slane %v82, %v1040
    %vm1043 = vcmask 523264
    %v1045 = vsel %vm1043, %v1036, 0
    %1047 = vmatprep.subr.mxu0 0.0
    %1048 = vmatpush1.msra.mxu0 %v74
    %1049 = vmatprep.subr.mxu0 0.0
    %1050 = vmatpush1.msra.mxu0 %v75
    %1051 = vmatprep.subr.mxu0 0.0
    %1052 = vmatpush1.msra.mxu0 %v76
    %1053 = vmatprep.subr.mxu0 0.0
    %1054 = vmatpush1.msra.mxu0 %v77
    %1055 = vmatprep.subr.mxu0 0.0
    %1056 = vmatpush1.msra.mxu0 %v78
    %1057 = vmatprep.subr.mxu0 0.0
    %1058 = vmatpush1.msra.mxu0 %v79
    %1059 = vmatprep.subr.mxu0 0.0
    %1060 = vmatpush1.msra.mxu0 %v80
    %1061 = vmatprep.subr.mxu0 0.0
    %1062 = vmatpush1.msra.mxu0 %v81
    %1063 = vmatprep.subr.mxu0 0.0
    %1064 = vmatpush1.msra.mxu0 0.0
    %1065 = vmatprep.subr.mxu0 0.0
    %1066 = vmatpush1.msra.mxu0 0.0
    %1067 = vmatprep.subr.mxu0 0.0
    %1068 = vmatpush1.msra.mxu0 0.0
    %1069 = vmatprep.subr.mxu0 0.0
    %1070 = vmatpush1.msra.mxu0 0.0
    %1071 = vmatprep.subr.mxu0 0.0
    %1072 = vmatpush1.msra.mxu0 0.0
    %1073 = vmatprep.subr.mxu0 0.0
    %1074 = vmatpush1.msra.mxu0 0.0
    %1075 = vmatprep.subr.mxu0 0.0
    %1076 = vmatpush1.msra.mxu0 0.0
    %1077 = vmatprep.subr.mxu0 0.0
    %1078 = vmatpush1.msra.mxu0 0.0
    %1079 = vmatprep.subr.mxu0 0.0
    %1080 = vmatpush1.msra.mxu0 0.0
    %1081 = vmatprep.subr.mxu0 0.0
    %1082 = vmatpush1.msra.mxu0 0.0
    %1083 = vmatprep.subr.mxu0 0.0
    %1084 = vmatpush1.msra.mxu0 0.0
    %1085 = vmatprep.subr.mxu0 0.0
    %1086 = vmatpush1.msra.mxu0 0.0
    %1087 = vmatprep.subr.mxu0 0.0
    %1088 = vmatpush1.msra.mxu0 0.0
    %1089 = vmatprep.subr.mxu0 0.0
    %1090 = vmatpush1.msra.mxu0 0.0
    %1091 = vmatprep.subr.mxu0 0.0
    %1092 = vmatpush1.msra.mxu0 0.0
    %1093 = vmatprep.subr.mxu0 0.0
    %1094 = vmatpush1.msra.mxu0 0.0
    %1095 = vmatprep.subr.mxu0 0.0
    %1096 = vmatpush1.msra.mxu0 0.0
    %1097 = vmatprep.subr.mxu0 0.0
    %1098 = vmatpush1.msra.mxu0 0.0
    %1099 = vmatprep.subr.mxu0 0.0
    %1100 = vmatpush1.msra.mxu0 0.0
    %1101 = vmatprep.subr.mxu0 0.0
    %1102 = vmatpush1.msra.mxu0 0.0
    %1103 = vmatprep.subr.mxu0 0.0
    %1104 = vmatpush1.msra.mxu0 0.0
    %1105 = vmatprep.subr.mxu0 0.0
    %1106 = vmatpush1.msra.mxu0 0.0
    %1107 = vmatprep.subr.mxu0 0.0
    %1108 = vmatpush1.msra.mxu0 0.0
    %1109 = vmatprep.subr.mxu0 0.0
    %1110 = vmatpush1.msra.mxu0 0.0
    %1111 = vmatprep.mubr.f32.mxu0 0.0
    %1112 = vmatmul.mubr.f32.gmra.mrb[0].mxu0 %v1045
    %v1113 = vpop.f32.mrb[0].mxu0
    %v1114 = vadd.f32 %v1041, %v1113
    %v1115 = vpop.f32.mrb[0].mxu0
    %1116 = vdwg.mxu0
    %v1117 = vadd.f32 %v956, %v1114
    %v1118 = vsel %vm94, %v1117, 0.0
    %1119 = vadd.xlane.f32.xlu0 %v1118
    %v1120 = vpop.xlane.xlu0 %1119
    %v1121 = vmul.f32 %v1120, %v932
    %v1122 = vsub.f32 %v1117, %v1121
    %v1123 = vmul.f32 %v1122, %v1122
    %v1124 = vsel %vm94, %v1123, 0.0
    %1125 = vadd.xlane.f32.xlu0 %v1124
    %v1126 = vpop.xlane.xlu0 %1125
    %v1127 = vmul.f32 %v1126, %v932
    %v1128 = vadd.f32 %v1127, 1e-05
    %v1129 = vrsqrt.pop %v1128
    %v1130 = vmul.f32 %v1122, %v1129
    %v1132 = vlaneseq
    %v1133 = vshrl.u32 %v1132, 7
    %v1134 = vsub.s32 0, %v1133
    %v1135 = vrot.slane %v85, %v1134
    %v1137 = vmul.f32 %v1130, %v1135
    %v1139 = vlaneseq
    %v1140 = vshrl.u32 %v1139, 7
    %v1141 = vsub.s32 0, %v1140
    %v1142 = vrot.slane %v86, %v1141
    %v1144 = vadd.f32 %v1137, %v1142
    %1145 = vst.msk [vmem:[#allocation5] sm:$0xff] %vm94, %v1144
    %s1146 = scalar_lea.vmem [#allocation2], 8
    %v1147 = vld [vmem:[%s1146] sm:$0xff]
    %v1149 = vsel %vm94, %v1147, 0
    %1151 = vmatprep.subr.mxu0 0.0
    %1152 = vmatpush1.msra.mxu0 %v59
    %1153 = vmatprep.subr.mxu0 0.0
    %1154 = vmatpush1.msra.mxu0 %v60
    %1155 = vmatprep.subr.mxu0 0.0
    %1156 = vmatpush1.msra.mxu0 %v61
    %1157 = vmatprep.subr.mxu0 0.0
    %1158 = vmatpush1.msra.mxu0 %v62
    %1159 = vmatprep.subr.mxu0 0.0
    %1160 = vmatpush1.msra.mxu0 0.0
    %1161 = vmatprep.subr.mxu0 0.0
    %1162 = vmatpush1.msra.mxu0 0.0
    %1163 = vmatprep.subr.mxu0 0.0
    %1164 = vmatpush1.msra.mxu0 0.0
    %1165 = vmatprep.subr.mxu0 0.0
    %1166 = vmatpush1.msra.mxu0 0.0
    %1167 = vmatprep.subr.mxu0 0.0
    %1168 = vmatpush1.msra.mxu0 0.0
    %1169 = vmatprep.subr.mxu0 0.0
    %1170 = vmatpush1.msra.mxu0 0.0
    %1171 = vmatprep.subr.mxu0 0.0
    %1172 = vmatpush1.msra.mxu0 0.0
    %1173 = vmatprep.subr.mxu0 0.0
    %1174 = vmatpush1.msra.mxu0 0.0
    %1175 = vmatprep.subr.mxu0 0.0
    %1176 = vmatpush1.msra.mxu0 0.0
    %1177 = vmatprep.subr.mxu0 0.0
    %1178 = vmatpush1.msra.mxu0 0.0
    %1179 = vmatprep.subr.mxu0 0.0
    %1180 = vmatpush1.msra.mxu0 0.0
    %1181 = vmatprep.subr.mxu0 0.0
    %1182 = vmatpush1.msra.mxu0 0.0
    %1183 = vmatprep.subr.mxu0 0.0
    %1184 = vmatpush1.msra.mxu0 0.0
    %1185 = vmatprep.subr.mxu0 0.0
    %1186 = vmatpush1.msra.mxu0 0.0
    %1187 = vmatprep.subr.mxu0 0.0
    %1188 = vmatpush1.msra.mxu0 0.0
    %1189 = vmatprep.subr.mxu0 0.0
    %1190 = vmatpush1.msra.mxu0 0.0
    %1191 = vmatprep.subr.mxu0 0.0
    %1192 = vmatpush1.msra.mxu0 0.0
    %1193 = vmatprep.subr.mxu0 0.0
    %1194 = vmatpush1.msra.mxu0 0.0
    %1195 = vmatprep.subr.mxu0 0.0
    %1196 = vmatpush1.msra.mxu0 0.0
    %1197 = vmatprep.subr.mxu0 0.0
    %1198 = vmatpush1.msra.mxu0 0.0
    %1199 = vmatprep.subr.mxu0 0.0
    %1200 = vmatpush1.msra.mxu0 0.0
    %1201 = vmatprep.subr.mxu0 0.0
    %1202 = vmatpush1.msra.mxu0 0.0
    %1203 = vmatprep.subr.mxu0 0.0
    %1204 = vmatpush1.msra.mxu0 0.0
    %1205 = vmatprep.subr.mxu0 0.0
    %1206 = vmatpush1.msra.mxu0 0.0
    %1207 = vmatprep.subr.mxu0 0.0
    %1208 = vmatpush1.msra.mxu0 0.0
    %1209 = vmatprep.subr.mxu0 0.0
    %1210 = vmatpush1.msra.mxu0 0.0
    %1211 = vmatprep.subr.mxu0 0.0
    %1212 = vmatpush1.msra.mxu0 0.0
    %1213 = vmatprep.subr.mxu0 0.0
    %1214 = vmatpush1.msra.mxu0 0.0
    %1215 = vmatprep.mubr.f32.mxu0 0.0
    %1216 = vmatmul.mubr.f32.gmra.mrb[0].mxu0 %v1149
    %v1217 = vpop.f32.mrb[0].mxu0
    %v1218 = vadd.f32 %v92, %v1217
    %v1219 = vpop.f32.mrb[0].mxu0
    %1220 = vdwg.mxu0
    %1222 = vrot.lane.b32.xlu0 %v1218, 96
    %v1223 = vpop.permute.xlu0 %1222
    %v1224 = vsel %vm171, %v1218, 0
    %v1226 = vsel %vm171, %v1223, 0
    %1228 = vmatprep.subr.mxu0 0.0
    %1229 = vmatpush1.xpose.msra.mxu0 %v1226
    %1230 = vmatprep.subr.mxu0 0.0
    %1231 = vmatpush1.xpose.msra.mxu0 0.0
    %1232 = vmatprep.subr.mxu0 0.0
    %1233 = vmatpush1.xpose.msra.mxu0 0.0
    %1234 = vmatprep.subr.mxu0 0.0
    %1235 = vmatpush1.xpose.msra.mxu0 0.0
    %1236 = vmatprep.subr.mxu0 0.0
    %1237 = vmatpush1.xpose.msra.mxu0 0.0
    %1238 = vmatprep.subr.mxu0 0.0
    %1239 = vmatpush1.xpose.msra.mxu0 0.0
    %1240 = vmatprep.subr.mxu0 0.0
    %1241 = vmatpush1.xpose.msra.mxu0 0.0
    %1242 = vmatprep.subr.mxu0 0.0
    %1243 = vmatpush1.xpose.msra.mxu0 0.0
    %1244 = vmatprep.subr.mxu0 0.0
    %1245 = vmatpush1.xpose.msra.mxu0 0.0
    %1246 = vmatprep.subr.mxu0 0.0
    %1247 = vmatpush1.xpose.msra.mxu0 0.0
    %1248 = vmatprep.subr.mxu0 0.0
    %1249 = vmatpush1.xpose.msra.mxu0 0.0
    %1250 = vmatprep.subr.mxu0 0.0
    %1251 = vmatpush1.xpose.msra.mxu0 0.0
    %1252 = vmatprep.subr.mxu0 0.0
    %1253 = vmatpush1.xpose.msra.mxu0 0.0
    %1254 = vmatprep.subr.mxu0 0.0
    %1255 = vmatpush1.xpose.msra.mxu0 0.0
    %1256 = vmatprep.subr.mxu0 0.0
    %1257 = vmatpush1.xpose.msra.mxu0 0.0
    %1258 = vmatprep.subr.mxu0 0.0
    %1259 = vmatpush1.xpose.msra.mxu0 0.0
    %1260 = vmatprep.subr.mxu0 0.0
    %1261 = vmatpush1.xpose.msra.mxu0 0.0
    %1262 = vmatprep.subr.mxu0 0.0
    %1263 = vmatpush1.xpose.msra.mxu0 0.0
    %1264 = vmatprep.subr.mxu0 0.0
    %1265 = vmatpush1.xpose.msra.mxu0 0.0
    %1266 = vmatprep.subr.mxu0 0.0
    %1267 = vmatpush1.xpose.msra.mxu0 0.0
    %1268 = vmatprep.subr.mxu0 0.0
    %1269 = vmatpush1.xpose.msra.mxu0 0.0
    %1270 = vmatprep.subr.mxu0 0.0
    %1271 = vmatpush1.xpose.msra.mxu0 0.0
    %1272 = vmatprep.subr.mxu0 0.0
    %1273 = vmatpush1.xpose.msra.mxu0 0.0
    %1274 = vmatprep.subr.mxu0 0.0
    %1275 = vmatpush1.xpose.msra.mxu0 0.0
    %1276 = vmatprep.subr.mxu0 0.0
    %1277 = vmatpush1.xpose.msra.mxu0 0.0
    %1278 = vmatprep.subr.mxu0 0.0
    %1279 = vmatpush1.xpose.msra.mxu0 0.0
    %1280 = vmatprep.subr.mxu0 0.0
    %1281 = vmatpush1.xpose.msra.mxu0 0.0
    %1282 = vmatprep.subr.mxu0 0.0
    %1283 = vmatpush1.xpose.msra.mxu0 0.0
    %1284 = vmatprep.subr.mxu0 0.0
    %1285 = vmatpush1.xpose.msra.mxu0 0.0
    %1286 = vmatprep.subr.mxu0 0.0
    %1287 = vmatpush1.xpose.msra.mxu0 0.0
    %1288 = vmatprep.subr.mxu0 0.0
    %1289 = vmatpush1.xpose.msra.mxu0 0.0
    %1290 = vmatprep.subr.mxu0 0.0
    %1291 = vmatpush1.xpose.msra.mxu0 0.0
    %1292 = vmatprep.mubr.f32.mxu0 0.0
    %1293 = vmatmul.mubr.f32.gmra.mrb[0].mxu0 %v1224
    %v1294 = vpop.f32.mrb[0].mxu0
    %v1295 = vadd.f32 0.0, %v1294
    %v1296 = vpop.f32.mrb[0].mxu0
    %1297 = vdwg.mxu0
    %v1298 = vmul.f32 %v1295, 0.35355338
    %v1299 = vsel %vm171, %v1298, -inf
    %1300 = vmax.xlane.f32.xlu0 %v1299
    %v1301 = vpop.xlane.xlu0 %1300
    %v1302 = vsub.f32 %v1298, %v1301
    %v1303 = vmul.f32 %v1302, 1.442695
    %v1304 = vpow.pop %v1303
    %v1305 = vsel %vm171, %v1304, 0.0
    %1306 = vadd.xlane.f32.xlu0 %v1305
    %v1307 = vpop.xlane.xlu0 %1306
    %v1308 = vrcp.pop %v1307
    %v1309 = vmul.f32 %v1304, %v1308
    %1310 = vrot.lane.b32.xlu0 %v1218, 64
    %v1311 = vpop.permute.xlu0 %1310
    %v1314 = vsel %vm171, %v1309, 0
    %1316 = vmatprep.subr.mxu0 0.0
    %1317 = vmatpush1.msra.mxu0 %v1311
    %1318 = vmatprep.subr.mxu0 0.0
    %1319 = vmatpush1.msra.mxu0 0.0
    %1320 = vmatprep.subr.mxu0 0.0
    %1321 = vmatpush1.msra.mxu0 0.0
    %1322 = vmatprep.subr.mxu0 0.0
    %1323 = vmatpush1.msra.mxu0 0.0
    %1324 = vmatprep.subr.mxu0 0.0
    %1325 = vmatpush1.msra.mxu0 0.0
    %1326 = vmatprep.subr.mxu0 0.0
    %1327 = vmatpush1.msra.mxu0 0.0
    %1328 = vmatprep.subr.mxu0 0.0
    %1329 = vmatpush1.msra.mxu0 0.0
    %1330 = vmatprep.subr.mxu0 0.0
    %1331 = vmatpush1.msra.mxu0 0.0
    %1332 = vmatprep.subr.mxu0 0.0
    %1333 = vmatpush1.msra.mxu0 0.0
    %1334 = vmatprep.subr.mxu0 0.0
    %1335 = vmatpush1.msra.mxu0 0.0
    %1336 = vmatprep.subr.mxu0 0.0
    %1337 = vmatpush1.msra.mxu0 0.0
    %1338 = vmatprep.subr.mxu0 0.0
    %1339 = vmatpush1.msra.mxu0 0.0
    %1340 = vmatprep.subr.mxu0 0.0
    %1341 = vmatpush1.msra.mxu0 0.0
    %1342 = vmatprep.subr.mxu0 0.0
    %1343 = vmatpush1.msra.mxu0 0.0
    %1344 = vmatprep.subr.mxu0 0.0
    %1345 = vmatpush1.msra.mxu0 0.0
    %1346 = vmatprep.subr.mxu0 0.0
    %1347 = vmatpush1.msra.mxu0 0.0
    %1348 = vmatprep.subr.mxu0 0.0
    %1349 = vmatpush1.msra.mxu0 0.0
    %1350 = vmatprep.subr.mxu0 0.0
    %1351 = vmatpush1.msra.mxu0 0.0
    %1352 = vmatprep.subr.mxu0 0.0
    %1353 = vmatpush1.msra.mxu0 0.0
    %1354 = vmatprep.subr.mxu0 0.0
    %1355 = vmatpush1.msra.mxu0 0.0
    %1356 = vmatprep.subr.mxu0 0.0
    %1357 = vmatpush1.msra.mxu0 0.0
    %1358 = vmatprep.subr.mxu0 0.0
    %1359 = vmatpush1.msra.mxu0 0.0
    %1360 = vmatprep.subr.mxu0 0.0
    %1361 = vmatpush1.msra.mxu0 0.0
    %1362 = vmatprep.subr.mxu0 0.0
    %1363 = vmatpush1.msra.mxu0 0.0
    %1364 = vmatprep.subr.mxu0 0.0
    %1365 = vmatpush1.msra.mxu0 0.0
    %1366 = vmatprep.subr.mxu0 0.0
    %1367 = vmatpush1.msra.mxu0 0.0
    %1368 = vmatprep.subr.mxu0 0.0
    %1369 = vmatpush1.msra.mxu0 0.0
    %1370 = vmatprep.subr.mxu0 0.0
    %1371 = vmatpush1.msra.mxu0 0.0
    %1372 = vmatprep.subr.mxu0 0.0
    %1373 = vmatpush1.msra.mxu0 0.0
    %1374 = vmatprep.subr.mxu0 0.0
    %1375 = vmatpush1.msra.mxu0 0.0
    %1376 = vmatprep.subr.mxu0 0.0
    %1377 = vmatpush1.msra.mxu0 0.0
    %1378 = vmatprep.subr.mxu0 0.0
    %1379 = vmatpush1.msra.mxu0 0.0
    %1380 = vmatprep.mubr.f32.mxu0 0.0
    %1381 = vmatmul.mubr.f32.gmra.mrb[0].mxu0 %v1314
    %v1382 = vpop.f32.mrb[0].mxu0
    %v1383 = vadd.f32 0.0, %v1382
    %v1384 = vpop.f32.mrb[0].mxu0
    %1385 = vdwg.mxu0
    %1386 = vrot.lane.b32.xlu0 %v1218, 120
    %v1387 = vpop.permute.xlu0 %1386
    %1388 = vrot.lane.b32.xlu0 %v1218, 88
    %v1389 = vpop.permute.xlu0 %1388
    %v1390 = vsel %vm171, %v1387, 0
    %v1392 = vsel %vm171, %v1389, 0
    %1394 = vmatprep.subr.mxu0 0.0
    %1395 = vmatpush1.xpose.msra.mxu0 %v1392
    %1396 = vmatprep.subr.mxu0 0.0
    %1397 = vmatpush1.xpose.msra.mxu0 0.0
    %1398 = vmatprep.subr.mxu0 0.0
    %1399 = vmatpush1.xpose.msra.mxu0 0.0
    %1400 = vmatprep.subr.mxu0 0.0
    %1401 = vmatpush1.xpose.msra.mxu0 0.0
    %1402 = vmatprep.subr.mxu0 0.0
    %1403 = vmatpush1.xpose.msra.mxu0 0.0
    %1404 = vmatprep.subr.mxu0 0.0
    %1405 = vmatpush1.xpose.msra.mxu0 0.0
    %1406 = vmatprep.subr.mxu0 0.0
    %1407 = vmatpush1.xpose.msra.mxu0 0.0
    %1408 = vmatprep.subr.mxu0 0.0
    %1409 = vmatpush1.xpose.msra.mxu0 0.0
    %1410 = vmatprep.subr.mxu0 0.0
    %1411 = vmatpush1.xpose.msra.mxu0 0.0
    %1412 = vmatprep.subr.mxu0 0.0
    %1413 = vmatpush1.xpose.msra.mxu0 0.0
    %1414 = vmatprep.subr.mxu0 0.0
    %1415 = vmatpush1.xpose.msra.mxu0 0.0
    %1416 = vmatprep.subr.mxu0 0.0
    %1417 = vmatpush1.xpose.msra.mxu0 0.0
    %1418 = vmatprep.subr.mxu0 0.0
    %1419 = vmatpush1.xpose.msra.mxu0 0.0
    %1420 = vmatprep.subr.mxu0 0.0
    %1421 = vmatpush1.xpose.msra.mxu0 0.0
    %1422 = vmatprep.subr.mxu0 0.0
    %1423 = vmatpush1.xpose.msra.mxu0 0.0
    %1424 = vmatprep.subr.mxu0 0.0
    %1425 = vmatpush1.xpose.msra.mxu0 0.0
    %1426 = vmatprep.subr.mxu0 0.0
    %1427 = vmatpush1.xpose.msra.mxu0 0.0
    %1428 = vmatprep.subr.mxu0 0.0
    %1429 = vmatpush1.xpose.msra.mxu0 0.0
    %1430 = vmatprep.subr.mxu0 0.0
    %1431 = vmatpush1.xpose.msra.mxu0 0.0
    %1432 = vmatprep.subr.mxu0 0.0
    %1433 = vmatpush1.xpose.msra.mxu0 0.0
    %1434 = vmatprep.subr.mxu0 0.0
    %1435 = vmatpush1.xpose.msra.mxu0 0.0
    %1436 = vmatprep.subr.mxu0 0.0
    %1437 = vmatpush1.xpose.msra.mxu0 0.0
    %1438 = vmatprep.subr.mxu0 0.0
    %1439 = vmatpush1.xpose.msra.mxu0 0.0
    %1440 = vmatprep.subr.mxu0 0.0
    %1441 = vmatpush1.xpose.msra.mxu0 0.0
    %1442 = vmatprep.subr.mxu0 0.0
    %1443 = vmatpush1.xpose.msra.mxu0 0.0
    %1444 = vmatprep.subr.mxu0 0.0
    %1445 = vmatpush1.xpose.msra.mxu0 0.0
    %1446 = vmatprep.subr.mxu0 0.0
    %1447 = vmatpush1.xpose.msra.mxu0 0.0
    %1448 = vmatprep.subr.mxu0 0.0
    %1449 = vmatpush1.xpose.msra.mxu0 0.0
    %1450 = vmatprep.subr.mxu0 0.0
    %1451 = vmatpush1.xpose.msra.mxu0 0.0
    %1452 = vmatprep.subr.mxu0 0.0
    %1453 = vmatpush1.xpose.msra.mxu0 0.0
    %1454 = vmatprep.subr.mxu0 0.0
    %1455 = vmatpush1.xpose.msra.mxu0 0.0
    %1456 = vmatprep.subr.mxu0 0.0
    %1457 = vmatpush1.xpose.msra.mxu0 0.0
    %1458 = vmatprep.mubr.f32.mxu0 0.0
    %1459 = vmatmul.mubr.f32.gmra.mrb[0].mxu0 %v1390
    %v1460 = vpop.f32.mrb[0].mxu0
    %v1461 = vadd.f32 0.0, %v1460
    %v1462 = vpop.f32.mrb[0].mxu0
    %1463 = vdwg.mxu0
    %v1464 = vmul.f32 %v1461, 0.35355338
    %v1465 = vsel %vm171, %v1464, -inf
    %1466 = vmax.xlane.f32.xlu0 %v1465
    %v1467 = vpop.xlane.xlu0 %1466
    %v1468 = vsub.f32 %v1464, %v1467
    %v1469 = vmul.f32 %v1468, 1.442695
    %v1470 = vpow.pop %v1469
    %v1471 = vsel %vm171, %v1470, 0.0
    %1472 = vadd.xlane.f32.xlu0 %v1471
    %v1473 = vpop.xlane.xlu0 %1472
    %v1474 = vrcp.pop %v1473
    %v1475 = vmul.f32 %v1470, %v1474
    %1476 = vrot.lane.b32.xlu0 %v1218, 56
    %v1477 = vpop.permute.xlu0 %1476
    %v1480 = vsel %vm171, %v1475, 0
    %1482 = vmatprep.subr.mxu0 0.0
    %1483 = vmatpush1.msra.mxu0 %v1477
    %1484 = vmatprep.subr.mxu0 0.0
    %1485 = vmatpush1.msra.mxu0 0.0
    %1486 = vmatprep.subr.mxu0 0.0
    %1487 = vmatpush1.msra.mxu0 0.0
    %1488 = vmatprep.subr.mxu0 0.0
    %1489 = vmatpush1.msra.mxu0 0.0
    %1490 = vmatprep.subr.mxu0 0.0
    %1491 = vmatpush1.msra.mxu0 0.0
    %1492 = vmatprep.subr.mxu0 0.0
    %1493 = vmatpush1.msra.mxu0 0.0
    %1494 = vmatprep.subr.mxu0 0.0
    %1495 = vmatpush1.msra.mxu0 0.0
    %1496 = vmatprep.subr.mxu0 0.0
    %1497 = vmatpush1.msra.mxu0 0.0
    %1498 = vmatprep.subr.mxu0 0.0
    %1499 = vmatpush1.msra.mxu0 0.0
    %1500 = vmatprep.subr.mxu0 0.0
    %1501 = vmatpush1.msra.mxu0 0.0
    %1502 = vmatprep.subr.mxu0 0.0
    %1503 = vmatpush1.msra.mxu0 0.0
    %1504 = vmatprep.subr.mxu0 0.0
    %1505 = vmatpush1.msra.mxu0 0.0
    %1506 = vmatprep.subr.mxu0 0.0
    %1507 = vmatpush1.msra.mxu0 0.0
    %1508 = vmatprep.subr.mxu0 0.0
    %1509 = vmatpush1.msra.mxu0 0.0
    %1510 = vmatprep.subr.mxu0 0.0
    %1511 = vmatpush1.msra.mxu0 0.0
    %1512 = vmatprep.subr.mxu0 0.0
    %1513 = vmatpush1.msra.mxu0 0.0
    %1514 = vmatprep.subr.mxu0 0.0
    %1515 = vmatpush1.msra.mxu0 0.0
    %1516 = vmatprep.subr.mxu0 0.0
    %1517 = vmatpush1.msra.mxu0 0.0
    %1518 = vmatprep.subr.mxu0 0.0
    %1519 = vmatpush1.msra.mxu0 0.0
    %1520 = vmatprep.subr.mxu0 0.0
    %1521 = vmatpush1.msra.mxu0 0.0
    %1522 = vmatprep.subr.mxu0 0.0
    %1523 = vmatpush1.msra.mxu0 0.0
    %1524 = vmatprep.subr.mxu0 0.0
    %1525 = vmatpush1.msra.mxu0 0.0
    %1526 = vmatprep.subr.mxu0 0.0
    %1527 = vmatpush1.msra.mxu0 0.0
    %1528 = vmatprep.subr.mxu0 0.0
    %1529 = vmatpush1.msra.mxu0 0.0
    %1530 = vmatprep.subr.mxu0 0.0
    %1531 = vmatpush1.msra.mxu0 0.0
    %1532 = vmatprep.subr.mxu0 0.0
    %1533 = vmatpush1.msra.mxu0 0.0
    %1534 = vmatprep.subr.mxu0 0.0
    %1535 = vmatpush1.msra.mxu0 0.0
    %1536 = vmatprep.subr.mxu0 0.0
    %1537 = vmatpush1.msra.mxu0 0.0
    %1538 = vmatprep.subr.mxu0 0.0
    %1539 = vmatpush1.msra.mxu0 0.0
    %1540 = vmatprep.subr.mxu0 0.0
    %1541 = vmatpush1.msra.mxu0 0.0
    %1542 = vmatprep.subr.mxu0 0.0
    %1543 = vmatpush1.msra.mxu0 0.0
    %1544 = vmatprep.subr.mxu0 0.0
    %1545 = vmatpush1.msra.mxu0 0.0
    %1546 = vmatprep.mubr.f32.mxu0 0.0
    %1547 = vmatmul.mubr.f32.gmra.mrb[0].mxu0 %v1480
    %v1548 = vpop.f32.mrb[0].mxu0
    %v1549 = vadd.f32 0.0, %v1548
    %v1550 = vpop.f32.mrb[0].mxu0
    %1551 = vdwg.mxu0
    %1552 = vrot.lane.b32.xlu0 %v1218, 112
    %v1553 = vpop.permute.xlu0 %1552
    %1554 = vrot.lane.b32.xlu0 %v1218, 80
    %v1555 = vpop.permute.xlu0 %1554
    %v1556 = vsel %vm171, %v1553, 0
    %v1558 = vsel %vm171, %v1555, 0
    %1560 = vmatprep.subr.mxu0 0.0
    %1561 = vmatpush1.xpose.msra.mxu0 %v1558
    %1562 = vmatprep.subr.mxu0 0.0
    %1563 = vmatpush1.xpose.msra.mxu0 0.0
    %1564 = vmatprep.subr.mxu0 0.0
    %1565 = vmatpush1.xpose.msra.mxu0 0.0
    %1566 = vmatprep.subr.mxu0 0.0
    %1567 = vmatpush1.xpose.msra.mxu0 0.0
    %1568 = vmatprep.subr.mxu0 0.0
    %1569 = vmatpush1.xpose.msra.mxu0 0.0
    %1570 = vmatprep.subr.mxu0 0.0
    %1571 = vmatpush1.xpose.msra.mxu0 0.0
    %1572 = vmatprep.subr.mxu0 0.0
    %1573 = vmatpush1.xpose.msra.mxu0 0.0
    %1574 = vmatprep.subr.mxu0 0.0
    %1575 = vmatpush1.xpose.msra.mxu0 0.0
    %1576 = vmatprep.subr.mxu0 0.0
    %1577 = vmatpush1.xpose.msra.mxu0 0.0
    %1578 = vmatprep.subr.mxu0 0.0
    %1579 = vmatpush1.xpose.msra.mxu0 0.0
    %1580 = vmatprep.subr.mxu0 0.0
    %1581 = vmatpush1.xpose.msra.mxu0 0.0
    %1582 = vmatprep.subr.mxu0 0.0
    %1583 = vmatpush1.xpose.msra.mxu0 0.0
    %1584 = vmatprep.subr.mxu0 0.0
    %1585 = vmatpush1.xpose.msra.mxu0 0.0
    %1586 = vmatprep.subr.mxu0 0.0
    %1587 = vmatpush1.xpose.msra.mxu0 0.0
    %1588 = vmatprep.subr.mxu0 0.0
    %1589 = vmatpush1.xpose.msra.mxu0 0.0
    %1590 = vmatprep.subr.mxu0 0.0
    %1591 = vmatpush1.xpose.msra.mxu0 0.0
    %1592 = vmatprep.subr.mxu0 0.0
    %1593 = vmatpush1.xpose.msra.mxu0 0.0
    %1594 = vmatprep.subr.mxu0 0.0
    %1595 = vmatpush1.xpose.msra.mxu0 0.0
    %1596 = vmatprep.subr.mxu0 0.0
    %1597 = vmatpush1.xpose.msra.mxu0 0.0
    %1598 = vmatprep.subr.mxu0 0.0
    %1599 = vmatpush1.xpose.msra.mxu0 0.0
    %1600 = vmatprep.subr.mxu0 0.0
    %1601 = vmatpush1.xpose.msra.mxu0 0.0
    %1602 = vmatprep.subr.mxu0 0.0
    %1603 = vmatpush1.xpose.msra.mxu0 0.0
    %1604 = vmatprep.subr.mxu0 0.0
    %1605 = vmatpush1.xpose.msra.mxu0 0.0
    %1606 = vmatprep.subr.mxu0 0.0
    %1607 = vmatpush1.xpose.msra.mxu0 0.0
    %1608 = vmatprep.subr.mxu0 0.0
    %1609 = vmatpush1.xpose.msra.mxu0 0.0
    %1610 = vmatprep.subr.mxu0 0.0
    %1611 = vmatpush1.xpose.msra.mxu0 0.0
    %1612 = vmatprep.subr.mxu0 0.0
    %1613 = vmatpush1.xpose.msra.mxu0 0.0
    %1614 = vmatprep.subr.mxu0 0.0
    %1615 = vmatpush1.xpose.msra.mxu0 0.0
    %1616 = vmatprep.subr.mxu0 0.0
    %1617 = vmatpush1.xpose.msra.mxu0 0.0
    %1618 = vmatprep.subr.mxu0 0.0
    %1619 = vmatpush1.xpose.msra.mxu0 0.0
    %1620 = vmatprep.subr.mxu0 0.0
    %1621 = vmatpush1.xpose.msra.mxu0 0.0
    %1622 = vmatprep.subr.mxu0 0.0
    %1623 = vmatpush1.xpose.msra.mxu0 0.0
    %1624 = vmatprep.mubr.f32.mxu0 0.0
    %1625 = vmatmul.mubr.f32.gmra.mrb[0].mxu0 %v1556
    %v1626 = vpop.f32.mrb[0].mxu0
    %v1627 = vadd.f32 0.0, %v1626
    %v1628 = vpop.f32.mrb[0].mxu0
    %1629 = vdwg.mxu0
    %v1630 = vmul.f32 %v1627, 0.35355338
    %v1631 = vsel %vm171, %v1630, -inf
    %1632 = vmax.xlane.f32.xlu0 %v1631
    %v1633 = vpop.xlane.xlu0 %1632
    %v1634 = vsub.f32 %v1630, %v1633
    %v1635 = vmul.f32 %v1634, 1.442695
    %v1636 = vpow.pop %v1635
    %v1637 = vsel %vm171, %v1636, 0.0
    %1638 = vadd.xlane.f32.xlu0 %v1637
    %v1639 = vpop.xlane.xlu0 %1638
    %v1640 = vrcp.pop %v1639
    %v1641 = vmul.f32 %v1636, %v1640
    %1642 = vrot.lane.b32.xlu0 %v1218, 48
    %v1643 = vpop.permute.xlu0 %1642
    %v1646 = vsel %vm171, %v1641, 0
    %1648 = vmatprep.subr.mxu0 0.0
    %1649 = vmatpush1.msra.mxu0 %v1643
    %1650 = vmatprep.subr.mxu0 0.0
    %1651 = vmatpush1.msra.mxu0 0.0
    %1652 = vmatprep.subr.mxu0 0.0
    %1653 = vmatpush1.msra.mxu0 0.0
    %1654 = vmatprep.subr.mxu0 0.0
    %1655 = vmatpush1.msra.mxu0 0.0
    %1656 = vmatprep.subr.mxu0 0.0
    %1657 = vmatpush1.msra.mxu0 0.0
    %1658 = vmatprep.subr.mxu0 0.0
    %1659 = vmatpush1.msra.mxu0 0.0
    %1660 = vmatprep.subr.mxu0 0.0
    %1661 = vmatpush1.msra.mxu0 0.0
    %1662 = vmatprep.subr.mxu0 0.0
    %1663 = vmatpush1.msra.mxu0 0.0
    %1664 = vmatprep.subr.mxu0 0.0
    %1665 = vmatpush1.msra.mxu0 0.0
    %1666 = vmatprep.subr.mxu0 0.0
    %1667 = vmatpush1.msra.mxu0 0.0
    %1668 = vmatprep.subr.mxu0 0.0
    %1669 = vmatpush1.msra.mxu0 0.0
    %1670 = vmatprep.subr.mxu0 0.0
    %1671 = vmatpush1.msra.mxu0 0.0
    %1672 = vmatprep.subr.mxu0 0.0
    %1673 = vmatpush1.msra.mxu0 0.0
    %1674 = vmatprep.subr.mxu0 0.0
    %1675 = vmatpush1.msra.mxu0 0.0
    %1676 = vmatprep.subr.mxu0 0.0
    %1677 = vmatpush1.msra.mxu0 0.0
    %1678 = vmatprep.subr.mxu0 0.0
    %1679 = vmatpush1.msra.mxu0 0.0
    %1680 = vmatprep.subr.mxu0 0.0
    %1681 = vmatpush1.msra.mxu0 0.0
    %1682 = vmatprep.subr.mxu0 0.0
    %1683 = vmatpush1.msra.mxu0 0.0
    %1684 = vmatprep.subr.mxu0 0.0
    %1685 = vmatpush1.msra.mxu0 0.0
    %1686 = vmatprep.subr.mxu0 0.0
    %1687 = vmatpush1.msra.mxu0 0.0
    %1688 = vmatprep.subr.mxu0 0.0
    %1689 = vmatpush1.msra.mxu0 0.0
    %1690 = vmatprep.subr.mxu0 0.0
    %1691 = vmatpush1.msra.mxu0 0.0
    %1692 = vmatprep.subr.mxu0 0.0
    %1693 = vmatpush1.msra.mxu0 0.0
    %1694 = vmatprep.subr.mxu0 0.0
    %1695 = vmatpush1.msra.mxu0 0.0
    %1696 = vmatprep.subr.mxu0 0.0
    %1697 = vmatpush1.msra.mxu0 0.0
    %1698 = vmatprep.subr.mxu0 0.0
    %1699 = vmatpush1.msra.mxu0 0.0
    %1700 = vmatprep.subr.mxu0 0.0
    %1701 = vmatpush1.msra.mxu0 0.0
    %1702 = vmatprep.subr.mxu0 0.0
    %1703 = vmatpush1.msra.mxu0 0.0
    %1704 = vmatprep.subr.mxu0 0.0
    %1705 = vmatpush1.msra.mxu0 0.0
    %1706 = vmatprep.subr.mxu0 0.0
    %1707 = vmatpush1.msra.mxu0 0.0
    %1708 = vmatprep.subr.mxu0 0.0
    %1709 = vmatpush1.msra.mxu0 0.0
    %1710 = vmatprep.subr.mxu0 0.0
    %1711 = vmatpush1.msra.mxu0 0.0
    %1712 = vmatprep.mubr.f32.mxu0 0.0
    %1713 = vmatmul.mubr.f32.gmra.mrb[0].mxu0 %v1646
    %v1714 = vpop.f32.mrb[0].mxu0
    %v1715 = vadd.f32 0.0, %v1714
    %v1716 = vpop.f32.mrb[0].mxu0
    %1717 = vdwg.mxu0
    %1718 = vrot.lane.b32.xlu0 %v1218, 104
    %v1719 = vpop.permute.xlu0 %1718
    %1720 = vrot.lane.b32.xlu0 %v1218, 72
    %v1721 = vpop.permute.xlu0 %1720
    %v1722 = vsel %vm171, %v1719, 0
    %v1724 = vsel %vm171, %v1721, 0
    %1726 = vmatprep.subr.mxu0 0.0
    %1727 = vmatpush1.xpose.msra.mxu0 %v1724
    %1728 = vmatprep.subr.mxu0 0.0
    %1729 = vmatpush1.xpose.msra.mxu0 0.0
    %1730 = vmatprep.subr.mxu0 0.0
    %1731 = vmatpush1.xpose.msra.mxu0 0.0
    %1732 = vmatprep.subr.mxu0 0.0
    %1733 = vmatpush1.xpose.msra.mxu0 0.0
    %1734 = vmatprep.subr.mxu0 0.0
    %1735 = vmatpush1.xpose.msra.mxu0 0.0
    %1736 = vmatprep.subr.mxu0 0.0
    %1737 = vmatpush1.xpose.msra.mxu0 0.0
    %1738 = vmatprep.subr.mxu0 0.0
    %1739 = vmatpush1.xpose.msra.mxu0 0.0
    %1740 = vmatprep.subr.mxu0 0.0
    %1741 = vmatpush1.xpose.msra.mxu0 0.0
    %1742 = vmatprep.subr.mxu0 0.0
    %1743 = vmatpush1.xpose.msra.mxu0 0.0
    %1744 = vmatprep.subr.mxu0 0.0
    %1745 = vmatpush1.xpose.msra.mxu0 0.0
    %1746 = vmatprep.subr.mxu0 0.0
    %1747 = vmatpush1.xpose.msra.mxu0 0.0
    %1748 = vmatprep.subr.mxu0 0.0
    %1749 = vmatpush1.xpose.msra.mxu0 0.0
    %1750 = vmatprep.subr.mxu0 0.0
    %1751 = vmatpush1.xpose.msra.mxu0 0.0
    %1752 = vmatprep.subr.mxu0 0.0
    %1753 = vmatpush1.xpose.msra.mxu0 0.0
    %1754 = vmatprep.subr.mxu0 0.0
    %1755 = vmatpush1.xpose.msra.mxu0 0.0
    %1756 = vmatprep.subr.mxu0 0.0
    %1757 = vmatpush1.xpose.msra.mxu0 0.0
    %1758 = vmatprep.subr.mxu0 0.0
    %1759 = vmatpush1.xpose.msra.mxu0 0.0
    %1760 = vmatprep.subr.mxu0 0.0
    %1761 = vmatpush1.xpose.msra.mxu0 0.0
    %1762 = vmatprep.subr.mxu0 0.0
    %1763 = vmatpush1.xpose.msra.mxu0 0.0
    %1764 = vmatprep.subr.mxu0 0.0
    %1765 = vmatpush1.xpose.msra.mxu0 0.0
    %1766 = vmatprep.subr.mxu0 0.0
    %1767 = vmatpush1.xpose.msra.mxu0 0.0
    %1768 = vmatprep.subr.mxu0 0.0
    %1769 = vmatpush1.xpose.msra.mxu0 0.0
    %1770 = vmatprep.subr.mxu0 0.0
    %1771 = vmatpush1.xpose.msra.mxu0 0.0
    %1772 = vmatprep.subr.mxu0 0.0
    %1773 = vmatpush1.xpose.msra.mxu0 0.0
    %1774 = vmatprep.subr.mxu0 0.0
    %1775 = vmatpush1.xpose.msra.mxu0 0.0
    %1776 = vmatprep.subr.mxu0 0.0
    %1777 = vmatpush1.xpose.msra.mxu0 0.0
    %1778 = vmatprep.subr.mxu0 0.0
    %1779 = vmatpush1.xpose.msra.mxu0 0.0
    %1780 = vmatprep.subr.mxu0 0.0
    %1781 = vmatpush1.xpose.msra.mxu0 0.0
    %1782 = vmatprep.subr.mxu0 0.0
    %1783 = vmatpush1.xpose.msra.mxu0 0.0
    %1784 = vmatprep.subr.mxu0 0.0
    %1785 = vmatpush1.xpose.msra.mxu0 0.0
    %1786 = vmatprep.subr.mxu0 0.0
    %1787 = vmatpush1.xpose.msra.mxu0 0.0
    %1788 = vmatprep.subr.mxu0 0.0
    %1789 = vmatpush1.xpose.msra.mxu0 0.0
    %1790 = vmatprep.mubr.f32.mxu0 0.0
    %1791 = vmatmul.mubr.f32.gmra.mrb[0].mxu0 %v1722
    %v1792 = vpop.f32.mrb[0].mxu0
    %v1793 = vadd.f32 0.0, %v1792
    %v1794 = vpop.f32.mrb[0].mxu0
    %1795 = vdwg.mxu0
    %v1796 = vmul.f32 %v1793, 0.35355338
    %v1797 = vsel %vm171, %v1796, -inf
    %1798 = vmax.xlane.f32.xlu0 %v1797
    %v1799 = vpop.xlane.xlu0 %1798
    %v1800 = vsub.f32 %v1796, %v1799
    %v1801 = vmul.f32 %v1800, 1.442695
    %v1802 = vpow.pop %v1801
    %v1803 = vsel %vm171, %v1802, 0.0
    %1804 = vadd.xlane.f32.xlu0 %v1803
    %v1805 = vpop.xlane.xlu0 %1804
    %v1806 = vrcp.pop %v1805
    %v1807 = vmul.f32 %v1802, %v1806
    %1808 = vrot.lane.b32.xlu0 %v1218, 40
    %v1809 = vpop.permute.xlu0 %1808
    %v1812 = vsel %vm171, %v1807, 0
    %1814 = vmatprep.subr.mxu0 0.0
    %1815 = vmatpush1.msra.mxu0 %v1809
    %1816 = vmatprep.subr.mxu0 0.0
    %1817 = vmatpush1.msra.mxu0 0.0
    %1818 = vmatprep.subr.mxu0 0.0
    %1819 = vmatpush1.msra.mxu0 0.0
    %1820 = vmatprep.subr.mxu0 0.0
    %1821 = vmatpush1.msra.mxu0 0.0
    %1822 = vmatprep.subr.mxu0 0.0
    %1823 = vmatpush1.msra.mxu0 0.0
    %1824 = vmatprep.subr.mxu0 0.0
    %1825 = vmatpush1.msra.mxu0 0.0
    %1826 = vmatprep.subr.mxu0 0.0
    %1827 = vmatpush1.msra.mxu0 0.0
    %1828 = vmatprep.subr.mxu0 0.0
    %1829 = vmatpush1.msra.mxu0 0.0
    %1830 = vmatprep.subr.mxu0 0.0
    %1831 = vmatpush1.msra.mxu0 0.0
    %1832 = vmatprep.subr.mxu0 0.0
    %1833 = vmatpush1.msra.mxu0 0.0
    %1834 = vmatprep.subr.mxu0 0.0
    %1835 = vmatpush1.msra.mxu0 0.0
    %1836 = vmatprep.subr.mxu0 0.0
    %1837 = vmatpush1.msra.mxu0 0.0
    %1838 = vmatprep.subr.mxu0 0.0
    %1839 = vmatpush1.msra.mxu0 0.0
    %1840 = vmatprep.subr.mxu0 0.0
    %1841 = vmatpush1.msra.mxu0 0.0
    %1842 = vmatprep.subr.mxu0 0.0
    %1843 = vmatpush1.msra.mxu0 0.0
    %1844 = vmatprep.subr.mxu0 0.0
    %1845 = vmatpush1.msra.mxu0 0.0
    %1846 = vmatprep.subr.mxu0 0.0
    %1847 = vmatpush1.msra.mxu0 0.0
    %1848 = vmatprep.subr.mxu0 0.0
    %1849 = vmatpush1.msra.mxu0 0.0
    %1850 = vmatprep.subr.mxu0 0.0
    %1851 = vmatpush1.msra.mxu0 0.0
    %1852 = vmatprep.subr.mxu0 0.0
    %1853 = vmatpush1.msra.mxu0 0.0
    %1854 = vmatprep.subr.mxu0 0.0
    %1855 = vmatpush1.msra.mxu0 0.0
    %1856 = vmatprep.subr.mxu0 0.0
    %1857 = vmatpush1.msra.mxu0 0.0
    %1858 = vmatprep.subr.mxu0 0.0
    %1859 = vmatpush1.msra.mxu0 0.0
    %1860 = vmatprep.subr.mxu0 0.0
    %1861 = vmatpush1.msra.mxu0 0.0
    %1862 = vmatprep.subr.mxu0 0.0
    %1863 = vmatpush1.msra.mxu0 0.0
    %1864 = vmatprep.subr.mxu0 0.0
    %1865 = vmatpush1.msra.mxu0 0.0
    %1866 = vmatprep.subr.mxu0 0.0
    %1867 = vmatpush1.msra.mxu0 0.0
    %1868 = vmatprep.subr.mxu0 0.0
    %1869 = vmatpush1.msra.mxu0 0.0
    %1870 = vmatprep.subr.mxu0 0.0
    %1871 = vmatpush1.msra.mxu0 0.0
    %1872 = vmatprep.subr.mxu0 0.0
    %1873 = vmatpush1.msra.mxu0 0.0
    %1874 = vmatprep.subr.mxu0 0.0
    %1875 = vmatpush1.msra.mxu0 0.0
    %1876 = vmatprep.subr.mxu0 0.0
    %1877 = vmatpush1.msra.mxu0 0.0
    %1878 = vmatprep.mubr.f32.mxu0 0.0
    %1879 = vmatmul.mubr.f32.gmra.mrb[0].mxu0 %v1812
    %v1880 = vpop.f32.mrb[0].mxu0
    %v1881 = vadd.f32 0.0, %v1880
    %v1882 = vpop.f32.mrb[0].mxu0
    %1883 = vdwg.mxu0
    %1885 = vrot.lane.b32.xlu0 %v1549, 8
    %v1886 = vpop.permute.xlu0 %1885
    %1889 = vrot.lane.b32.xlu0 %v1715, 16
    %v1890 = vpop.permute.xlu0 %1889
    %1893 = vrot.lane.b32.xlu0 %v1881, 24
    %v1894 = vpop.permute.xlu0 %1893
    %v1896 = vsel %vm171, %v1383, %v1886
    %v1897 = vsel %vm845, %v1896, %v1890
    %v1898 = vsel %vm847, %v1897, %v1894
    %v1900 = vsel %vm94, %v1898, 0
    %1902 = vmatprep.subr.mxu0 0.0
    %1903 = vmatpush1.msra.mxu0 %v64
    %1904 = vmatprep.subr.mxu0 0.0
    %1905 = vmatpush1.msra.mxu0 %v65
    %1906 = vmatprep.subr.mxu0 0.0
    %1907 = vmatpush1.msra.mxu0 %v66
    %1908 = vmatprep.subr.mxu0 0.0
    %1909 = vmatpush1.msra.mxu0 %v67
    %1910 = vmatprep.subr.mxu0 0.0
    %1911 = vmatpush1.msra.mxu0 0.0
    %1912 = vmatprep.subr.mxu0 0.0
    %1913 = vmatpush1.msra.mxu0 0.0
    %1914 = vmatprep.subr.mxu0 0.0
    %1915 = vmatpush1.msra.mxu0 0.0
    %1916 = vmatprep.subr.mxu0 0.0
    %1917 = vmatpush1.msra.mxu0 0.0
    %1918 = vmatprep.subr.mxu0 0.0
    %1919 = vmatpush1.msra.mxu0 0.0
    %1920 = vmatprep.subr.mxu0 0.0
    %1921 = vmatpush1.msra.mxu0 0.0
    %1922 = vmatprep.subr.mxu0 0.0
    %1923 = vmatpush1.msra.mxu0 0.0
    %1924 = vmatprep.subr.mxu0 0.0
    %1925 = vmatpush1.msra.mxu0 0.0
    %1926 = vmatprep.subr.mxu0 0.0
    %1927 = vmatpush1.msra.mxu0 0.0
    %1928 = vmatprep.subr.mxu0 0.0
    %1929 = vmatpush1.msra.mxu0 0.0
    %1930 = vmatprep.subr.mxu0 0.0
    %1931 = vmatpush1.msra.mxu0 0.0
    %1932 = vmatprep.subr.mxu0 0.0
    %1933 = vmatpush1.msra.mxu0 0.0
    %1934 = vmatprep.subr.mxu0 0.0
    %1935 = vmatpush1.msra.mxu0 0.0
    %1936 = vmatprep.subr.mxu0 0.0
    %1937 = vmatpush1.msra.mxu0 0.0
    %1938 = vmatprep.subr.mxu0 0.0
    %1939 = vmatpush1.msra.mxu0 0.0
    %1940 = vmatprep.subr.mxu0 0.0
    %1941 = vmatpush1.msra.mxu0 0.0
    %1942 = vmatprep.subr.mxu0 0.0
    %1943 = vmatpush1.msra.mxu0 0.0
    %1944 = vmatprep.subr.mxu0 0.0
    %1945 = vmatpush1.msra.mxu0 0.0
    %1946 = vmatprep.subr.mxu0 0.0
    %1947 = vmatpush1.msra.mxu0 0.0
    %1948 = vmatprep.subr.mxu0 0.0
    %1949 = vmatpush1.msra.mxu0 0.0
    %1950 = vmatprep.subr.mxu0 0.0
    %1951 = vmatpush1.msra.mxu0 0.0
    %1952 = vmatprep.subr.mxu0 0.0
    %1953 = vmatpush1.msra.mxu0 0.0
    %1954 = vmatprep.subr.mxu0 0.0
    %1955 = vmatpush1.msra.mxu0 0.0
    %1956 = vmatprep.subr.mxu0 0.0
    %1957 = vmatpush1.msra.mxu0 0.0
    %1958 = vmatprep.subr.mxu0 0.0
    %1959 = vmatpush1.msra.mxu0 0.0
    %1960 = vmatprep.subr.mxu0 0.0
    %1961 = vmatpush1.msra.mxu0 0.0
    %1962 = vmatprep.subr.mxu0 0.0
    %1963 = vmatpush1.msra.mxu0 0.0
    %1964 = vmatprep.subr.mxu0 0.0
    %1965 = vmatpush1.msra.mxu0 0.0
    %1966 = vmatprep.mubr.f32.mxu0 0.0
    %1967 = vmatmul.mubr.f32.gmra.mrb[0].mxu0 %v1900
    %v1968 = vpop.f32.mrb[0].mxu0
    %v1969 = vadd.f32 %v853, %v1968
    %v1970 = vpop.f32.mrb[0].mxu0
    %1971 = vdwg.mxu0
    %v1972 = vadd.f32 %v1147, %v1969
    %v1973 = vsel %vm94, %v1972, 0.0
    %1974 = vadd.xlane.f32.xlu0 %v1973
    %v1975 = vpop.xlane.xlu0 %1974
    %v1976 = vmul.f32 %v1975, %v932
    %v1977 = vsub.f32 %v1972, %v1976
    %v1978 = vmul.f32 %v1977, %v1977
    %v1979 = vsel %vm94, %v1978, 0.0
    %1980 = vadd.xlane.f32.xlu0 %v1979
    %v1981 = vpop.xlane.xlu0 %1980
    %v1982 = vmul.f32 %v1981, %v932
    %v1983 = vadd.f32 %v1982, 1e-05
    %v1984 = vrsqrt.pop %v1983
    %v1985 = vmul.f32 %v1977, %v1984
    %v1986 = vmul.f32 %v1985, %v947
    %v1987 = vadd.f32 %v1986, %v954
    %v1989 = vsel %vm94, %v1987, 0
    %1991 = vmatprep.subr.mxu0 0.0
    %1992 = vmatpush1.msra.mxu0 %v69
    %1993 = vmatprep.subr.mxu0 0.0
    %1994 = vmatpush1.msra.mxu0 %v70
    %1995 = vmatprep.subr.mxu0 0.0
    %1996 = vmatpush1.msra.mxu0 %v71
    %1997 = vmatprep.subr.mxu0 0.0
    %1998 = vmatpush1.msra.mxu0 %v72
    %1999 = vmatprep.subr.mxu0 0.0
    %2000 = vmatpush1.msra.mxu0 0.0
    %2001 = vmatprep.subr.mxu0 0.0
    %2002 = vmatpush1.msra.mxu0 0.0
    %2003 = vmatprep.subr.mxu0 0.0
    %2004 = vmatpush1.msra.mxu0 0.0
    %2005 = vmatprep.subr.mxu0 0.0
    %2006 = vmatpush1.msra.mxu0 0.0
    %2007 = vmatprep.subr.mxu0 0.0
    %2008 = vmatpush1.msra.mxu0 0.0
    %2009 = vmatprep.subr.mxu0 0.0
    %2010 = vmatpush1.msra.mxu0 0.0
    %2011 = vmatprep.subr.mxu0 0.0
    %2012 = vmatpush1.msra.mxu0 0.0
    %2013 = vmatprep.subr.mxu0 0.0
    %2014 = vmatpush1.msra.mxu0 0.0
    %2015 = vmatprep.subr.mxu0 0.0
    %2016 = vmatpush1.msra.mxu0 0.0
    %2017 = vmatprep.subr.mxu0 0.0
    %2018 = vmatpush1.msra.mxu0 0.0
    %2019 = vmatprep.subr.mxu0 0.0
    %2020 = vmatpush1.msra.mxu0 0.0
    %2021 = vmatprep.subr.mxu0 0.0
    %2022 = vmatpush1.msra.mxu0 0.0
    %2023 = vmatprep.subr.mxu0 0.0
    %2024 = vmatpush1.msra.mxu0 0.0
    %2025 = vmatprep.subr.mxu0 0.0
    %2026 = vmatpush1.msra.mxu0 0.0
    %2027 = vmatprep.subr.mxu0 0.0
    %2028 = vmatpush1.msra.mxu0 0.0
    %2029 = vmatprep.subr.mxu0 0.0
    %2030 = vmatpush1.msra.mxu0 0.0
    %2031 = vmatprep.subr.mxu0 0.0
    %2032 = vmatpush1.msra.mxu0 0.0
    %2033 = vmatprep.subr.mxu0 0.0
    %2034 = vmatpush1.msra.mxu0 0.0
    %2035 = vmatprep.subr.mxu0 0.0
    %2036 = vmatpush1.msra.mxu0 0.0
    %2037 = vmatprep.subr.mxu0 0.0
    %2038 = vmatpush1.msra.mxu0 0.0
    %2039 = vmatprep.subr.mxu0 0.0
    %2040 = vmatpush1.msra.mxu0 0.0
    %2041 = vmatprep.subr.mxu0 0.0
    %2042 = vmatpush1.msra.mxu0 0.0
    %2043 = vmatprep.subr.mxu0 0.0
    %2044 = vmatpush1.msra.mxu0 0.0
    %2045 = vmatprep.subr.mxu0 0.0
    %2046 = vmatpush1.msra.mxu0 0.0
    %2047 = vmatprep.subr.mxu0 0.0
    %2048 = vmatpush1.msra.mxu0 0.0
    %2049 = vmatprep.subr.mxu0 0.0
    %2050 = vmatpush1.msra.mxu0 0.0
    %2051 = vmatprep.subr.mxu0 0.0
    %2052 = vmatpush1.msra.mxu0 0.0
    %2053 = vmatprep.subr.mxu0 0.0
    %2054 = vmatpush1.msra.mxu0 0.0
    %2055 = vmatprep.mubr.f32.mxu0 0.0
    %2056 = vmatmul.mubr.f32.gmra.mrb[0].mxu0 %v1989
    %v2057 = vpop.f32.mrb[0].mxu0
    %v2058 = vadd.f32 %v961, %v2057
    %v2059 = vpop.f32.mrb[0].mxu0
    %2060 = vdwg.mxu0
    %v2061 = vmax.f32 %v2058, 0.0
    %v2063 = vsel %vm1043, %v2061, 0
    %2065 = vmatprep.subr.mxu0 0.0
    %2066 = vmatpush1.msra.mxu0 %v74
    %2067 = vmatprep.subr.mxu0 0.0
    %2068 = vmatpush1.msra.mxu0 %v75
    %2069 = vmatprep.subr.mxu0 0.0
    %2070 = vmatpush1.msra.mxu0 %v76
    %2071 = vmatprep.subr.mxu0 0.0
    %2072 = vmatpush1.msra.mxu0 %v77
    %2073 = vmatprep.subr.mxu0 0.0
    %2074 = vmatpush1.msra.mxu0 %v78
    %2075 = vmatprep.subr.mxu0 0.0
    %2076 = vmatpush1.msra.mxu0 %v79
    %2077 = vmatprep.subr.mxu0 0.0
    %2078 = vmatpush1.msra.mxu0 %v80
    %2079 = vmatprep.subr.mxu0 0.0
    %2080 = vmatpush1.msra.mxu0 %v81
    %2081 = vmatprep.subr.mxu0 0.0
    %2082 = vmatpush1.msra.mxu0 0.0
    %2083 = vmatprep.subr.mxu0 0.0
    %2084 = vmatpush1.msra.mxu0 0.0
    %2085 = vmatprep.subr.mxu0 0.0
    %2086 = vmatpush1.msra.mxu0 0.0
    %2087 = vmatprep.subr.mxu0 0.0
    %2088 = vmatpush1.msra.mxu0 0.0
    %2089 = vmatprep.subr.mxu0 0.0
    %2090 = vmatpush1.msra.mxu0 0.0
    %2091 = vmatprep.subr.mxu0 0.0
    %2092 = vmatpush1.msra.mxu0 0.0
    %2093 = vmatprep.subr.mxu0 0.0
    %2094 = vmatpush1.msra.mxu0 0.0
    %2095 = vmatprep.subr.mxu0 0.0
    %2096 = vmatpush1.msra.mxu0 0.0
    %2097 = vmatprep.subr.mxu0 0.0
    %2098 = vmatpush1.msra.mxu0 0.0
    %2099 = vmatprep.subr.mxu0 0.0
    %2100 = vmatpush1.msra.mxu0 0.0
    %2101 = vmatprep.subr.mxu0 0.0
    %2102 = vmatpush1.msra.mxu0 0.0
    %2103 = vmatprep.subr.mxu0 0.0
    %2104 = vmatpush1.msra.mxu0 0.0
    %2105 = vmatprep.subr.mxu0 0.0
    %2106 = vmatpush1.msra.mxu0 0.0
    %2107 = vmatprep.subr.mxu0 0.0
    %2108 = vmatpush1.msra.mxu0 0.0
    %2109 = vmatprep.subr.mxu0 0.0
    %2110 = vmatpush1.msra.mxu0 0.0
    %2111 = vmatprep.subr.mxu0 0.0
    %2112 = vmatpush1.msra.mxu0 0.0
    %2113 = vmatprep.subr.mxu0 0.0
    %2114 = vmatpush1.msra.mxu0 0.0
    %2115 = vmatprep.subr.mxu0 0.0
    %2116 = vmatpush1.msra.mxu0 0.0
    %2117 = vmatprep.subr.mxu0 0.0
    %2118 = vmatpush1.msra.mxu0 0.0
    %2119 = vmatprep.subr.mxu0 0.0
    %2120 = vmatpush1.msra.mxu0 0.0
    %2121 = vmatprep.subr.mxu0 0.0
    %2122 = vmatpush1.msra.mxu0 0.0
    %2123 = vmatprep.subr.mxu0 0.0
    %2124 = vmatpush1.msra.mxu0 0.0
    %2125 = vmatprep.subr.mxu0 0.0
    %2126 = vmatpush1.msra.mxu0 0.0
    %2127 = vmatprep.subr.mxu0 0.0
    %2128 = vmatpush1.msra.mxu0 0.0
    %2129 = vmatprep.mubr.f32.mxu0 0.0
    %2130 = vmatmul.mubr.f32.gmra.mrb[0].mxu0 %v2063
    %v2131 = vpop.f32.mrb[0].mxu0
    %v2132 = vadd.f32 %v1041, %v2131
    %v2133 = vpop.f32.mrb[0].mxu0
    %2134 = vdwg.mxu0
    %v2135 = vadd.f32 %v1987, %v2132
    %v2136 = vsel %vm94, %v2135, 0.0
    %2137 = vadd.xlane.f32.xlu0 %v2136
    %v2138 = vpop.xlane.xlu0 %2137
    %v2139 = vmul.f32 %v2138, %v932
    %v2140 = vsub.f32 %v2135, %v2139
    %v2141 = vmul.f32 %v2140, %v2140
    %v2142 = vsel %vm94, %v2141, 0.0
    %2143 = vadd.xlane.f32.xlu0 %v2142
    %v2144 = vpop.xlane.xlu0 %2143
    %v2145 = vmul.f32 %v2144, %v932
    %v2146 = vadd.f32 %v2145, 1e-05
    %v2147 = vrsqrt.pop %v2146
    %v2148 = vmul.f32 %v2140, %v2147
    %v2149 = vmul.f32 %v2148, %v1135
    %v2150 = vadd.f32 %v2149, %v1142
    %s2151 = scalar_lea.vmem [#allocation5], 8
    %2152 = vst.msk [vmem:[%s2151] sm:$0xff] %vm94, %v2150
    // Predicated region
    $region58: #{tpu_custom_call.1} parent=1 // pred_check
      _
    $region59: #{tpu_custom_call.1} parent=1 // pred_check_branch
      %2154 = sbr.rel (0) target = $region61
    $region60: #{tpu_custom_call.1} parent=1 // pred_region
      %s2156 = ssub.s32 256, 256
      %2157 = vsyncadd [#allocation4], %s2156
      %s2158 = sshll.u32 [#allocation5], 4
      %s2159 = int_to_ptr.vmem [resolvable:$true] %s2158
      %2164 = dma.vmem_to_hbm [thread:$0]  %s2159, 256, %s13, [#allocation4], 128, 128, 8
    $region61: #{tpu_custom_call.1} parent=1 // pred_fallthru
      _
    // Predicated region
    $region62: #{tpu_custom_call.1} parent=1 // pred_check
      _
    $region63: #{tpu_custom_call.1} parent=1 // pred_check_branch
      %2166 = sbr.rel (0) target = $region65
    $region64: #{tpu_custom_call.1} parent=1 // pred_region
      %2167 = dma.done [#allocation4], 256
    $region65: #{tpu_custom_call.1} parent=1 // pred_fallthru
      _
    %2168 = vsyncpa [#allocation3], 1
    %2169 = vsyncpa [#allocation4], 1

</llo_original>
